<compile_context>
chip_gen: v7x
topology: tpu7x:2x2x1
jax: 0.10.0
libtpu: 0.0.40
codegen_flags: <defaults>
</compile_context>

<pallas_src>
import functools

import jax
import jax.numpy as jnp
from jax import lax
from jax.experimental import pallas as pl
from jax.experimental.pallas import tpu as pltpu

EPS = 1e-8          # matches GroupNorm(..., eps=1e-08) in the PyTorch module
KSIZE = 5
PAD = 2             # (KSIZE - 1) // 2
assert KSIZE == 2 * PAD + 1


# ----------------------------------------------------------------------------
# In-kernel helpers
# ----------------------------------------------------------------------------
def _gn(y, gamma, beta, alpha=None):
    """GroupNorm(num_groups=1) over the whole (T, C) slab.

    Stats: per-channel partial sums along the time (sublane) axis, then a
    cheap lane reduce of the (1, C) rows -- instead of two whole-slab scalar
    reductions.  f32 throughout.
    # TODO(synk): switch to two-pass / Welford variance when the time axis is
    # tiled for v7x (single-pass E[y^2]-E[y]^2 cancels for huge T*C).
    """
    n = float(y.shape[0] * y.shape[1])
    s_c = jnp.sum(y, axis=0, keepdims=True)          # (1, C) sublane reduce
    ss_c = jnp.sum(y * y, axis=0, keepdims=True)     # (1, C) sublane reduce
    mean = jnp.sum(s_c) * (1.0 / n)
    var = jnp.maximum(jnp.sum(ss_c) * (1.0 / n) - mean * mean, 0.0)
    yn = (y - mean) * lax.rsqrt(var + EPS)
    yn = yn * gamma + beta
    if alpha is not None:
        yn = jnp.where(yn >= 0, yn, alpha * yn)
    return yn


def _mxu_dot(a, w_bf16):
    # bf16 MXU inputs (weights pre-cast once in the wrapper), f32 accumulation.
    return jnp.dot(a.astype(jnp.bfloat16), w_bf16,
                   preferred_element_type=jnp.float32)


# ----------------------------------------------------------------------------
# Fused kernel: runs the whole block for one batch element (grid over batch)
# ----------------------------------------------------------------------------
def _fused_block_kernel(depth, slot_offs, slot_lens,
                        x_ref,                                   # (1, T, Cout)
                        pw_ref, pb_ref, pg_ref, pbe_ref, pa_ref,  # proj_1x1
                        dww_ref, dwb_ref, dwg_ref, dwbe_ref,      # spp_dw stack
                        fg_ref, fbe_ref, fa_ref,                  # final_norm
                        ew_ref, eb_ref, eg_ref, ebe_ref,          # conv_1x1_exp
                        mg_ref, mbe_ref, ma_ref,                  # module_act
                        o_ref,                                    # (1, T, Cout)
                        buf_ref):                                 # VMEM slots
    x = x_ref[0]                                   # (T, Cout) f32
    t_len = x.shape[0]
    c_in = buf_ref.shape[1]
    zero_pad = jnp.zeros((PAD, c_in), jnp.float32)

    # Zero the left/right pad rows of every level slot once per grid step
    # (slot 0's left pad is clobbered by the previous step's merge staging).
    for off, ln in zip(slot_offs, slot_lens):
        buf_ref[off:off + PAD, :] = zero_pad
        buf_ref[off + ln - PAD:off + ln, :] = zero_pad

    # ---- proj_1x1: Conv1d(Cout -> Cin, k=1) + GroupNorm + PReLU ------------
    y = _mxu_dot(x, pw_ref[...]) + pb_ref[...]
    # Single home: slot 0's interior IS level-0's conv input (no staging copy).
    buf_ref[slot_offs[0] + PAD:slot_offs[0] + PAD + t_len, :] = _gn(
        y, pg_ref[...], pbe_ref[...], pa_ref[...])

    # ---- depthwise k=5 pyramid (stride 1, then stride 2 repeatedly) --------
    t_in = t_len
    merged = None
    for k in range(depth):
        stride = 1 if k == 0 else 2
        t_out = (t_in + 2 * PAD - KSIZE) // stride + 1
        off = slot_offs[k]
        # every tap read stays inside this slot's zero-padded rows
        assert KSIZE - 1 + stride * (t_out - 1) < slot_lens[k]
        w_k = dww_ref[k]                               # (KSIZE, Cin)
        taps = []
        for j in range(KSIZE):                         # shift-and-add taps
            if stride == 1:
                seg = buf_ref[pl.ds(off + j, t_out), :]
            else:
                seg = buf_ref[pl.ds(off + j, t_out, stride=2), :]
            taps.append(w_k[j:j + 1, :] * seg)         # VPU FMA
        # fused 5-tap sum: one accumulator materialization, not five RMW passes
        conv = taps[0] + taps[1] + taps[2] + taps[3] + taps[4] + dwb_ref[k]
        out_k = _gn(conv, dwg_ref[k], dwbe_ref[k], None)
        if k + 1 < depth:
            # single write: home doubles as next level's conv input and as the
            # merge-stage skip tensor.
            nxt = slot_offs[k + 1] + PAD
            buf_ref[nxt:nxt + t_out, :] = out_k
        else:
            merged = out_k                             # innermost level: value
        t_in = t_out

    # ---- merge pyramid: nearest-2x upsample + skip add ---------------------
    # Slot 0 (proj output) is dead after level 0; reuse its rows as the
    # interleave staging area.
    # TODO(synk): value-level interleave (repeat/reshape) would drop this
    # scratch round trip; kept as strided stores for lowering robustness.
    for k in range(depth - 2, -1, -1):
        t_small = merged.shape[0]
        buf_ref[pl.ds(0, t_small, stride=2), :] = merged
        buf_ref[pl.ds(1, t_small, stride=2), :] = merged
        skip_lo = slot_offs[k + 1] + PAD
        merged = (buf_ref[skip_lo:skip_lo + 2 * t_small, :]
                  + buf_ref[0:2 * t_small, :])

    # ---- final_norm -> conv_1x1_exp + GN -> module_act(exp + x) ------------
    fin = _gn(merged, fg_ref[...], fbe_ref[...], fa_ref[...])     # (T, Cin)
    e = _mxu_dot(fin, ew_ref[...]) + eb_ref[...]                  # (T, Cout)
    e = _gn(e, eg_ref[...], ebe_ref[...], None)
    o_ref[0] = _gn(e + x, mg_ref[...], mbe_ref[...], ma_ref[...])


# ----------------------------------------------------------------------------
# Wrapper
# ----------------------------------------------------------------------------
def _prep_kernel_params(p):
    """One-time reshape/transpose/cast of parameters for the (T, C) layout."""
    row = lambda a: a.reshape(1, -1)
    return [
        p['proj_w'].T.astype(jnp.bfloat16),           # (Cout, Cin), MXU bf16
        row(p['proj_b']), row(p['proj_g']), row(p['proj_be']), row(p['proj_a']),
        jnp.transpose(p['dw_w'], (0, 2, 1)),          # (depth, KSIZE, Cin)
        p['dw_b'][:, None, :], p['dw_g'][:, None, :], p['dw_be'][:, None, :],
        row(p['fin_g']), row(p['fin_be']), row(p['fin_a']),
        p['exp_w'].T.astype(jnp.bfloat16),            # (Cin, Cout), MXU bf16
        row(p['exp_b']), row(p['exp_g']), row(p['exp_be']),
        row(p['mod_g']), row(p['mod_be']), row(p['mod_a']),
    ]


def _vmem_limit_bytes():
    """~96 MiB on 128-MiB parts (v5e/v6e), ~48 MiB on 64-MiB parts (v7x)."""
    try:
        cap = int(pltpu.get_tpu_info().vmem_capacity_bytes)
        return max(32 * 1024 * 1024, min(100 * 1024 * 1024, (cap * 3) // 4))
    except Exception:
        return 48 * 1024 * 1024        # conservative, known-good fallback


def block_forward(x, p, depth=4):
    bsz, cout, t = x.shape
    cin = p['proj_w'].shape[0]
    assert t % (1 << max(depth - 1, 0)) == 0, \
        "time length must divide 2**(depth-1)"

    # per-level zero-padded slots inside one VMEM scratch buffer
    lens_in = [t] + [t // (1 << (k - 1)) for k in range(1, depth)]
    slot_lens = tuple(li + 2 * PAD for li in lens_in)
    slot_offs, acc = [], 0
    for ln in slot_lens:
        slot_offs.append(acc)
        acc += ln
    slot_offs = tuple(slot_offs)
    total_rows = acc

    params = _prep_kernel_params(p)
    # TODO(synk): keep the surrounding model channel-last (B, T, C) end-to-end
    # to drop these two HBM-roundtrip transposes entirely.
    x_t = jnp.transpose(x, (0, 2, 1))                 # (B, T, Cout)

    def const_spec(shape):
        nd = len(shape)
        return pl.BlockSpec(shape, lambda b: (0,) * nd)

    act_spec = pl.BlockSpec((1, t, cout), lambda b: (b, 0, 0))

    out_t = pl.pallas_call(
        functools.partial(_fused_block_kernel, depth, slot_offs, slot_lens),
        out_shape=jax.ShapeDtypeStruct((bsz, t, cout), jnp.float32),
        grid=(bsz,),
        in_specs=[act_spec] + [const_spec(a.shape) for a in params],
        out_specs=act_spec,
        scratch_shapes=[pltpu.VMEM((total_rows, cin), jnp.float32)],
        compiler_params=pltpu.CompilerParams(
            dimension_semantics=("parallel",),        # batch across TCs (v7x)
            vmem_limit_bytes=_vmem_limit_bytes()),
    )(x_t, *params)
    return jnp.transpose(out_t, (0, 2, 1))            # back to (B, Cout, T)


# ----------------------------------------------------------------------------
# Pure-JAX reference (independent NCL formulation) for a correctness check.
# The 1x1 convolutions use the same bf16-input / f32-accumulation precision
# policy as the TPU kernel; everything else is f32.
# ----------------------------------------------------------------------------
def _ref_gn(y, gamma, beta, alpha=None):
    mean = y.mean(axis=(1, 2), keepdims=True)
    var = ((y - mean) ** 2).mean(axis=(1, 2), keepdims=True)
    yn = (y - mean) * lax.rsqrt(var + EPS)
    yn = yn * gamma[None, :, None] + beta[None, :, None]
    if alpha is not None:
        yn = jnp.where(yn >= 0, yn, alpha[None, :, None] * yn)
    return yn


def ref_block(x, p, depth=4):
    bf = jnp.bfloat16
    y = jnp.einsum('io,bot->bit', p['proj_w'].astype(bf), x.astype(bf),
                   preferred_element_type=jnp.float32) + p['proj_b'][None, :, None]
    cur = _ref_gn(y, p['proj_g'], p['proj_be'], p['proj_a'])
    outs = []
    for k in range(depth):
        stride = 1 if k == 0 else 2
        w = p['dw_w'][k][:, None, :]                              # (Cin, 1, KSIZE)
        yk = lax.conv_general_dilated(
            cur, w, window_strides=(stride,), padding=[(PAD, PAD)],
            dimension_numbers=('NCH', 'OIH', 'NCH'),
            feature_group_count=cur.shape[1])
        yk = yk + p['dw_b'][k][None, :, None]
        cur = _ref_gn(yk, p['dw_g'][k], p['dw_be'][k], None)
        outs.append(cur)
    for _ in range(depth - 1):
        last = outs.pop(-1)
        outs[-1] = outs[-1] + jnp.repeat(last, 2, axis=-1)
    fin = _ref_gn(outs[-1], p['fin_g'], p['fin_be'], p['fin_a'])
    e = jnp.einsum('oi,bit->bot', p['exp_w'].astype(bf), fin.astype(bf),
                   preferred_element_type=jnp.float32) + p['exp_b'][None, :, None]
    e = _ref_gn(e, p['exp_g'], p['exp_be'], None)
    return _ref_gn(e + x, p['mod_g'], p['mod_be'], p['mod_a'])


# ----------------------------------------------------------------------------
# Deterministic parameter construction + smoke test
# ----------------------------------------------------------------------------
def make_params(key, cout, cin, depth):
    ks = iter(jax.random.split(key, 32))

    def nrm(shape, scale):
        return scale * jax.random.normal(next(ks), shape, jnp.float32)

    return {
        # proj_1x1: Conv1d(cout -> cin, k=1) + GroupNorm(1, cin) + PReLU(cin)
        'proj_w': nrm((cin, cout), 0.2), 'proj_b': nrm((cin,), 0.1),
        'proj_g': 1.0 + nrm((cin,), 0.1), 'proj_be': nrm((cin,), 0.1),
        'proj_a': 0.25 + nrm((cin,), 0.05),
        # depthwise pyramid: kSize=5, per-channel weights + bias + GroupNorm
        'dw_w': nrm((depth, cin, KSIZE), 0.3), 'dw_b': nrm((depth, cin), 0.1),
        'dw_g': 1.0 + nrm((depth, cin), 0.1), 'dw_be': nrm((depth, cin), 0.1),
        # final_norm (GN + PReLU on cin)
        'fin_g': 1.0 + nrm((cin,), 0.1), 'fin_be': nrm((cin,), 0.1),
        'fin_a': 0.25 + nrm((cin,), 0.05),
        # conv_1x1_exp: Conv1d(cin -> cout, k=1) + GroupNorm(1, cout)
        'exp_w': nrm((cout, cin), 0.2), 'exp_b': nrm((cout,), 0.1),
        'exp_g': 1.0 + nrm((cout,), 0.1), 'exp_be': nrm((cout,), 0.1),
        # module_act (GN + PReLU on cout)
        'mod_g': 1.0 + nrm((cout,), 0.1), 'mod_be': nrm((cout,), 0.1),
        'mod_a': 0.25 + nrm((cout,), 0.05),
    }


if __name__ == "__main__":
    B, COUT, CIN, T, DEPTH = 2, 8, 32, 16, 4     # x: (batch, out_channels, time)

    key = jax.random.PRNGKey(0)
    k_x, k_p = jax.random.split(key)
    x = jax.random.normal(k_x, (B, COUT, T), jnp.float32)
    params = make_params(k_p, COUT, CIN, DEPTH)

    out = jax.block_until_ready(block_forward(x, params, DEPTH))
    ref = jax.block_until_ready(ref_block(x, params, DEPTH))

    assert out.shape == (B, COUT, T), out.shape
    err = float(jnp.max(jnp.abs(out - ref)))
    assert err < 5e-2, f"max abs diff vs reference too large: {err}"
    print("KERNEL_OK")
</pallas_src>

<mosaic_0001>
module attributes {stable_mosaic.version = 11 : i64} {
  func.func @_fused_block_kernel(%arg0: i32, %arg1: memref<1x16x8xf32, #tpu.memory_space<vmem>>, %arg2: memref<8x32xbf16, #tpu.memory_space<vmem>>, %arg3: memref<1x32xf32, #tpu.memory_space<vmem>>, %arg4: memref<1x32xf32, #tpu.memory_space<vmem>>, %arg5: memref<1x32xf32, #tpu.memory_space<vmem>>, %arg6: memref<1x32xf32, #tpu.memory_space<vmem>>, %arg7: memref<4x5x32xf32, #tpu.memory_space<vmem>>, %arg8: memref<4x1x32xf32, #tpu.memory_space<vmem>>, %arg9: memref<4x1x32xf32, #tpu.memory_space<vmem>>, %arg10: memref<4x1x32xf32, #tpu.memory_space<vmem>>, %arg11: memref<1x32xf32, #tpu.memory_space<vmem>>, %arg12: memref<1x32xf32, #tpu.memory_space<vmem>>, %arg13: memref<1x32xf32, #tpu.memory_space<vmem>>, %arg14: memref<32x8xbf16, #tpu.memory_space<vmem>>, %arg15: memref<1x8xf32, #tpu.memory_space<vmem>>, %arg16: memref<1x8xf32, #tpu.memory_space<vmem>>, %arg17: memref<1x8xf32, #tpu.memory_space<vmem>>, %arg18: memref<1x8xf32, #tpu.memory_space<vmem>>, %arg19: memref<1x8xf32, #tpu.memory_space<vmem>>, %arg20: memref<1x8xf32, #tpu.memory_space<vmem>>, %arg21: memref<1x16x8xf32, #tpu.memory_space<vmem>>, %arg22: memref<60x32xf32, #tpu.memory_space<vmem>>) attributes {dimension_semantics = [#tpu.dimension_semantics<parallel>], iteration_bounds = array<i64: 2>, scalar_prefetch = 0 : i64, scratch_operands = 1 : i64, tpu.core_type = #tpu.core_type<tc>, window_params = [{transform_indices = @transform_0, window_bounds = array<i64: 1, 16, 8>}, {pipeline_mode = #tpu.pipeline_mode<synchronous>, transform_indices = @transform_1, window_bounds = array<i64: 8, 32>}, {pipeline_mode = #tpu.pipeline_mode<synchronous>, transform_indices = @transform_2, window_bounds = array<i64: 1, 32>}, {pipeline_mode = #tpu.pipeline_mode<synchronous>, transform_indices = @transform_3, window_bounds = array<i64: 1, 32>}, {pipeline_mode = #tpu.pipeline_mode<synchronous>, transform_indices = @transform_4, window_bounds = array<i64: 1, 32>}, {pipeline_mode = #tpu.pipeline_mode<synchronous>, transform_indices = @transform_5, window_bounds = array<i64: 1, 32>}, {pipeline_mode = #tpu.pipeline_mode<synchronous>, transform_indices = @transform_6, window_bounds = array<i64: 4, 5, 32>}, {pipeline_mode = #tpu.pipeline_mode<synchronous>, transform_indices = @transform_7, window_bounds = array<i64: 4, 1, 32>}, {pipeline_mode = #tpu.pipeline_mode<synchronous>, transform_indices = @transform_8, window_bounds = array<i64: 4, 1, 32>}, {pipeline_mode = #tpu.pipeline_mode<synchronous>, transform_indices = @transform_9, window_bounds = array<i64: 4, 1, 32>}, {pipeline_mode = #tpu.pipeline_mode<synchronous>, transform_indices = @transform_10, window_bounds = array<i64: 1, 32>}, {pipeline_mode = #tpu.pipeline_mode<synchronous>, transform_indices = @transform_11, window_bounds = array<i64: 1, 32>}, {pipeline_mode = #tpu.pipeline_mode<synchronous>, transform_indices = @transform_12, window_bounds = array<i64: 1, 32>}, {pipeline_mode = #tpu.pipeline_mode<synchronous>, transform_indices = @transform_13, window_bounds = array<i64: 32, 8>}, {pipeline_mode = #tpu.pipeline_mode<synchronous>, transform_indices = @transform_14, window_bounds = array<i64: 1, 8>}, {pipeline_mode = #tpu.pipeline_mode<synchronous>, transform_indices = @transform_15, window_bounds = array<i64: 1, 8>}, {pipeline_mode = #tpu.pipeline_mode<synchronous>, transform_indices = @transform_16, window_bounds = array<i64: 1, 8>}, {pipeline_mode = #tpu.pipeline_mode<synchronous>, transform_indices = @transform_17, window_bounds = array<i64: 1, 8>}, {pipeline_mode = #tpu.pipeline_mode<synchronous>, transform_indices = @transform_18, window_bounds = array<i64: 1, 8>}, {pipeline_mode = #tpu.pipeline_mode<synchronous>, transform_indices = @transform_19, window_bounds = array<i64: 1, 8>}, {transform_indices = @transform_20, window_bounds = array<i64: 1, 16, 8>}]} {
    %c0 = arith.constant 0 : index
    %c0_0 = arith.constant 0 : index
    %c0_1 = arith.constant 0 : index
    %0 = vector.load %arg1[%c0, %c0_0, %c0_1] : memref<1x16x8xf32, #tpu.memory_space<vmem>>, vector<1x16x8xf32>
    %1 = vector.shape_cast %0 : vector<1x16x8xf32> to vector<16x8xf32>
    %cst = arith.constant 0.000000e+00 : f32
    %2 = vector.broadcast %cst : f32 to vector<2x32xf32>
    %c0_2 = arith.constant 0 : index
    %c0_3 = arith.constant 0 : index
    %3 = vector.load %arg22[%c0_2, %c0_3] : memref<60x32xf32, #tpu.memory_space<vmem>>, vector<2x32xf32>
    tpu.vector_store %arg22[%c0_2, %c0_3], %2 {strides = array<i32>} : memref<60x32xf32, #tpu.memory_space<vmem>>, vector<2x32xf32>,
    %c18 = arith.constant 18 : index
    %c0_4 = arith.constant 0 : index
    %4 = vector.load %arg22[%c18, %c0_4] : memref<60x32xf32, #tpu.memory_space<vmem>>, vector<2x32xf32>
    tpu.vector_store %arg22[%c18, %c0_4], %2 {strides = array<i32>} : memref<60x32xf32, #tpu.memory_space<vmem>>, vector<2x32xf32>,
    %c20 = arith.constant 20 : index
    %c0_5 = arith.constant 0 : index
    %5 = vector.load %arg22[%c20, %c0_5] : memref<60x32xf32, #tpu.memory_space<vmem>>, vector<2x32xf32>
    tpu.vector_store %arg22[%c20, %c0_5], %2 {strides = array<i32>} : memref<60x32xf32, #tpu.memory_space<vmem>>, vector<2x32xf32>,
    %c38 = arith.constant 38 : index
    %c0_6 = arith.constant 0 : index
    %6 = vector.load %arg22[%c38, %c0_6] : memref<60x32xf32, #tpu.memory_space<vmem>>, vector<2x32xf32>
    tpu.vector_store %arg22[%c38, %c0_6], %2 {strides = array<i32>} : memref<60x32xf32, #tpu.memory_space<vmem>>, vector<2x32xf32>,
    %c40 = arith.constant 40 : index
    %c0_7 = arith.constant 0 : index
    %7 = vector.load %arg22[%c40, %c0_7] : memref<60x32xf32, #tpu.memory_space<vmem>>, vector<2x32xf32>
    tpu.vector_store %arg22[%c40, %c0_7], %2 {strides = array<i32>} : memref<60x32xf32, #tpu.memory_space<vmem>>, vector<2x32xf32>,
    %c50 = arith.constant 50 : index
    %c0_8 = arith.constant 0 : index
    %8 = vector.load %arg22[%c50, %c0_8] : memref<60x32xf32, #tpu.memory_space<vmem>>, vector<2x32xf32>
    tpu.vector_store %arg22[%c50, %c0_8], %2 {strides = array<i32>} : memref<60x32xf32, #tpu.memory_space<vmem>>, vector<2x32xf32>,
    %c52 = arith.constant 52 : index
    %c0_9 = arith.constant 0 : index
    %9 = vector.load %arg22[%c52, %c0_9] : memref<60x32xf32, #tpu.memory_space<vmem>>, vector<2x32xf32>
    tpu.vector_store %arg22[%c52, %c0_9], %2 {strides = array<i32>} : memref<60x32xf32, #tpu.memory_space<vmem>>, vector<2x32xf32>,
    %c58 = arith.constant 58 : index
    %c0_10 = arith.constant 0 : index
    %10 = vector.load %arg22[%c58, %c0_10] : memref<60x32xf32, #tpu.memory_space<vmem>>, vector<2x32xf32>
    tpu.vector_store %arg22[%c58, %c0_10], %2 {strides = array<i32>} : memref<60x32xf32, #tpu.memory_space<vmem>>, vector<2x32xf32>,
    %c0_11 = arith.constant 0 : index
    %c0_12 = arith.constant 0 : index
    %11 = vector.load %arg2[%c0_11, %c0_12] : memref<8x32xbf16, #tpu.memory_space<vmem>>, vector<8x32xbf16>
    %12 = arith.truncf %1 : vector<16x8xf32> to vector<16x8xbf16>
    %cst_13 = arith.constant dense<0.000000e+00> : vector<16x32xf32>
    %13 = tpu.matmul %12, %11, %cst_13 {dimension_numbers = #tpu.dot_dimension_numbers<[1], [0], [0], [1], [0, 0, 1, 1], [], []>} : vector<16x8xbf16>, vector<8x32xbf16>, vector<16x32xf32> -> vector<16x32xf32>
    %c0_14 = arith.constant 0 : index
    %c0_15 = arith.constant 0 : index
    %14 = vector.load %arg3[%c0_14, %c0_15] : memref<1x32xf32, #tpu.memory_space<vmem>>, vector<1x32xf32>
    %15 = vector.broadcast %14 : vector<1x32xf32> to vector<16x32xf32>
    %16 = arith.addf %13, %15 : vector<16x32xf32>
    %c0_16 = arith.constant 0 : index
    %c0_17 = arith.constant 0 : index
    %17 = vector.load %arg4[%c0_16, %c0_17] : memref<1x32xf32, #tpu.memory_space<vmem>>, vector<1x32xf32>
    %c0_18 = arith.constant 0 : index
    %c0_19 = arith.constant 0 : index
    %18 = vector.load %arg5[%c0_18, %c0_19] : memref<1x32xf32, #tpu.memory_space<vmem>>, vector<1x32xf32>
    %c0_20 = arith.constant 0 : index
    %c0_21 = arith.constant 0 : index
    %19 = vector.load %arg6[%c0_20, %c0_21] : memref<1x32xf32, #tpu.memory_space<vmem>>, vector<1x32xf32>
    %cst_22 = arith.constant dense<0.000000e+00> : vector<32xf32>
    %20 = vector.multi_reduction <add>, %16, %cst_22 [0] : vector<16x32xf32> to vector<32xf32>
    %21 = vector.shape_cast %20 : vector<32xf32> to vector<1x32xf32>
    %22 = arith.mulf %16, %16 : vector<16x32xf32>
    %cst_23 = arith.constant dense<0.000000e+00> : vector<32xf32>
    %23 = vector.multi_reduction <add>, %22, %cst_23 [0] : vector<16x32xf32> to vector<32xf32>
    %24 = vector.shape_cast %23 : vector<32xf32> to vector<1x32xf32>
    %25 = vector.shape_cast %21 : vector<1x32xf32> to vector<1x1x32xf32>
    %cst_24 = arith.constant dense<0.000000e+00> : vector<1xf32>
    %26 = vector.multi_reduction <add>, %25, %cst_24 [1, 2] : vector<1x1x32xf32> to vector<1xf32>
    %27 = vector.shape_cast %26 : vector<1xf32> to vector<1x1x1xf32>
    %28 = vector.extract %27[0, 0, 0] : f32 from vector<1x1x1xf32>
    %cst_25 = arith.constant 0.001953125 : f32
    %29 = arith.mulf %28, %cst_25 : f32
    %30 = vector.shape_cast %24 : vector<1x32xf32> to vector<1x1x32xf32>
    %cst_26 = arith.constant dense<0.000000e+00> : vector<1xf32>
    %31 = vector.multi_reduction <add>, %30, %cst_26 [1, 2] : vector<1x1x32xf32> to vector<1xf32>
    %32 = vector.shape_cast %31 : vector<1xf32> to vector<1x1x1xf32>
    %33 = vector.extract %32[0, 0, 0] : f32 from vector<1x1x1xf32>
    %cst_27 = arith.constant 0.001953125 : f32
    %34 = arith.mulf %33, %cst_27 : f32
    %35 = arith.mulf %29, %29 : f32
    %36 = arith.subf %34, %35 : f32
    %cst_28 = arith.constant 0.000000e+00 : f32
    %37 = arith.maximumf %36, %cst_28 : f32
    %38 = vector.broadcast %29 : f32 to vector<16x32xf32>
    %39 = arith.subf %16, %38 : vector<16x32xf32>
    %cst_29 = arith.constant 9.99999993E-9 : f32
    %40 = arith.addf %37, %cst_29 : f32
    %41 = math.rsqrt %40 : f32
    %42 = vector.broadcast %41 : f32 to vector<16x32xf32>
    %43 = arith.mulf %39, %42 : vector<16x32xf32>
    %44 = vector.broadcast %17 : vector<1x32xf32> to vector<16x32xf32>
    %45 = arith.mulf %43, %44 : vector<16x32xf32>
    %46 = vector.broadcast %18 : vector<1x32xf32> to vector<16x32xf32>
    %47 = arith.addf %45, %46 : vector<16x32xf32>
    %cst_30 = arith.constant 0.000000e+00 : f32
    %48 = vector.broadcast %cst_30 : f32 to vector<16x32xf32>
    %49 = arith.cmpf oge, %47, %48 : vector<16x32xf32>
    %50 = vector.broadcast %19 : vector<1x32xf32> to vector<16x32xf32>
    %51 = arith.mulf %50, %47 : vector<16x32xf32>
    %52 = arith.select %49, %47, %51 : vector<16x32xi1>, vector<16x32xf32>
    %c2 = arith.constant 2 : index
    %c0_31 = arith.constant 0 : index
    %53 = vector.load %arg22[%c2, %c0_31] : memref<60x32xf32, #tpu.memory_space<vmem>>, vector<16x32xf32>
    tpu.vector_store %arg22[%c2, %c0_31], %52 {strides = array<i32>} : memref<60x32xf32, #tpu.memory_space<vmem>>, vector<16x32xf32>,
    %c0_32 = arith.constant 0 : index
    %c0_33 = arith.constant 0 : index
    %c0_34 = arith.constant 0 : index
    %54 = vector.load %arg7[%c0_32, %c0_33, %c0_34] : memref<4x5x32xf32, #tpu.memory_space<vmem>>, vector<1x5x32xf32>
    %55 = vector.shape_cast %54 : vector<1x5x32xf32> to vector<5x32xf32>
    %c0_35 = arith.constant 0 : index
    %c0_36 = arith.constant 0 : index
    %56 = vector.load %arg22[%c0_35, %c0_36] : memref<60x32xf32, #tpu.memory_space<vmem>>, vector<16x32xf32>
    %57 = vector.extract_strided_slice %55 {offsets = [0, 0], sizes = [1, 32], strides = [1, 1]} : vector<5x32xf32> to vector<1x32xf32>
    %58 = vector.broadcast %57 : vector<1x32xf32> to vector<16x32xf32>
    %59 = arith.mulf %58, %56 : vector<16x32xf32>
    %c1 = arith.constant 1 : index
    %c0_37 = arith.constant 0 : index
    %60 = vector.load %arg22[%c1, %c0_37] : memref<60x32xf32, #tpu.memory_space<vmem>>, vector<16x32xf32>
    %61 = vector.extract_strided_slice %55 {offsets = [1, 0], sizes = [1, 32], strides = [1, 1]} : vector<5x32xf32> to vector<1x32xf32>
    %62 = vector.broadcast %61 : vector<1x32xf32> to vector<16x32xf32>
    %63 = arith.mulf %62, %60 : vector<16x32xf32>
    %c2_38 = arith.constant 2 : index
    %c0_39 = arith.constant 0 : index
    %64 = vector.load %arg22[%c2_38, %c0_39] : memref<60x32xf32, #tpu.memory_space<vmem>>, vector<16x32xf32>
    %65 = vector.extract_strided_slice %55 {offsets = [2, 0], sizes = [1, 32], strides = [1, 1]} : vector<5x32xf32> to vector<1x32xf32>
    %66 = vector.broadcast %65 : vector<1x32xf32> to vector<16x32xf32>
    %67 = arith.mulf %66, %64 : vector<16x32xf32>
    %c3 = arith.constant 3 : index
    %c0_40 = arith.constant 0 : index
    %68 = vector.load %arg22[%c3, %c0_40] : memref<60x32xf32, #tpu.memory_space<vmem>>, vector<16x32xf32>
    %69 = vector.extract_strided_slice %55 {offsets = [3, 0], sizes = [1, 32], strides = [1, 1]} : vector<5x32xf32> to vector<1x32xf32>
    %70 = vector.broadcast %69 : vector<1x32xf32> to vector<16x32xf32>
    %71 = arith.mulf %70, %68 : vector<16x32xf32>
    %c4 = arith.constant 4 : index
    %c0_41 = arith.constant 0 : index
    %72 = vector.load %arg22[%c4, %c0_41] : memref<60x32xf32, #tpu.memory_space<vmem>>, vector<16x32xf32>
    %73 = vector.extract_strided_slice %55 {offsets = [4, 0], sizes = [1, 32], strides = [1, 1]} : vector<5x32xf32> to vector<1x32xf32>
    %74 = vector.broadcast %73 : vector<1x32xf32> to vector<16x32xf32>
    %75 = arith.mulf %74, %72 : vector<16x32xf32>
    %76 = arith.addf %59, %63 : vector<16x32xf32>
    %77 = arith.addf %76, %67 : vector<16x32xf32>
    %78 = arith.addf %77, %71 : vector<16x32xf32>
    %79 = arith.addf %78, %75 : vector<16x32xf32>
    %c0_42 = arith.constant 0 : index
    %c0_43 = arith.constant 0 : index
    %c0_44 = arith.constant 0 : index
    %80 = vector.load %arg8[%c0_42, %c0_43, %c0_44] : memref<4x1x32xf32, #tpu.memory_space<vmem>>, vector<1x1x32xf32>
    %81 = vector.shape_cast %80 : vector<1x1x32xf32> to vector<1x32xf32>
    %82 = vector.broadcast %81 : vector<1x32xf32> to vector<16x32xf32>
    %83 = arith.addf %79, %82 : vector<16x32xf32>
    %c0_45 = arith.constant 0 : index
    %c0_46 = arith.constant 0 : index
    %c0_47 = arith.constant 0 : index
    %84 = vector.load %arg9[%c0_45, %c0_46, %c0_47] : memref<4x1x32xf32, #tpu.memory_space<vmem>>, vector<1x1x32xf32>
    %85 = vector.shape_cast %84 : vector<1x1x32xf32> to vector<1x32xf32>
    %c0_48 = arith.constant 0 : index
    %c0_49 = arith.constant 0 : index
    %c0_50 = arith.constant 0 : index
    %86 = vector.load %arg10[%c0_48, %c0_49, %c0_50] : memref<4x1x32xf32, #tpu.memory_space<vmem>>, vector<1x1x32xf32>
    %87 = vector.shape_cast %86 : vector<1x1x32xf32> to vector<1x32xf32>
    %cst_51 = arith.constant dense<0.000000e+00> : vector<32xf32>
    %88 = vector.multi_reduction <add>, %83, %cst_51 [0] : vector<16x32xf32> to vector<32xf32>
    %89 = vector.shape_cast %88 : vector<32xf32> to vector<1x32xf32>
    %90 = arith.mulf %83, %83 : vector<16x32xf32>
    %cst_52 = arith.constant dense<0.000000e+00> : vector<32xf32>
    %91 = vector.multi_reduction <add>, %90, %cst_52 [0] : vector<16x32xf32> to vector<32xf32>
    %92 = vector.shape_cast %91 : vector<32xf32> to vector<1x32xf32>
    %93 = vector.shape_cast %89 : vector<1x32xf32> to vector<1x1x32xf32>
    %cst_53 = arith.constant dense<0.000000e+00> : vector<1xf32>
    %94 = vector.multi_reduction <add>, %93, %cst_53 [1, 2] : vector<1x1x32xf32> to vector<1xf32>
    %95 = vector.shape_cast %94 : vector<1xf32> to vector<1x1x1xf32>
    %96 = vector.extract %95[0, 0, 0] : f32 from vector<1x1x1xf32>
    %cst_54 = arith.constant 0.001953125 : f32
    %97 = arith.mulf %96, %cst_54 : f32
    %98 = vector.shape_cast %92 : vector<1x32xf32> to vector<1x1x32xf32>
    %cst_55 = arith.constant dense<0.000000e+00> : vector<1xf32>
    %99 = vector.multi_reduction <add>, %98, %cst_55 [1, 2] : vector<1x1x32xf32> to vector<1xf32>
    %100 = vector.shape_cast %99 : vector<1xf32> to vector<1x1x1xf32>
    %101 = vector.extract %100[0, 0, 0] : f32 from vector<1x1x1xf32>
    %cst_56 = arith.constant 0.001953125 : f32
    %102 = arith.mulf %101, %cst_56 : f32
    %103 = arith.mulf %97, %97 : f32
    %104 = arith.subf %102, %103 : f32
    %cst_57 = arith.constant 0.000000e+00 : f32
    %105 = arith.maximumf %104, %cst_57 : f32
    %106 = vector.broadcast %97 : f32 to vector<16x32xf32>
    %107 = arith.subf %83, %106 : vector<16x32xf32>
    %cst_58 = arith.constant 9.99999993E-9 : f32
    %108 = arith.addf %105, %cst_58 : f32
    %109 = math.rsqrt %108 : f32
    %110 = vector.broadcast %109 : f32 to vector<16x32xf32>
    %111 = arith.mulf %107, %110 : vector<16x32xf32>
    %112 = vector.broadcast %85 : vector<1x32xf32> to vector<16x32xf32>
    %113 = arith.mulf %111, %112 : vector<16x32xf32>
    %114 = vector.broadcast %87 : vector<1x32xf32> to vector<16x32xf32>
    %115 = arith.addf %113, %114 : vector<16x32xf32>
    %c22 = arith.constant 22 : index
    %c0_59 = arith.constant 0 : index
    %116 = vector.load %arg22[%c22, %c0_59] : memref<60x32xf32, #tpu.memory_space<vmem>>, vector<16x32xf32>
    tpu.vector_store %arg22[%c22, %c0_59], %115 {strides = array<i32>} : memref<60x32xf32, #tpu.memory_space<vmem>>, vector<16x32xf32>,
    %c1_60 = arith.constant 1 : index
    %c0_61 = arith.constant 0 : index
    %c0_62 = arith.constant 0 : index
    %117 = vector.load %arg7[%c1_60, %c0_61, %c0_62] : memref<4x5x32xf32, #tpu.memory_space<vmem>>, vector<1x5x32xf32>
    %118 = vector.shape_cast %117 : vector<1x5x32xf32> to vector<5x32xf32>
    %c20_63 = arith.constant 20 : index
    %c0_64 = arith.constant 0 : index
    %119 = tpu.strided_load %arg22[%c20_63, %c0_64] {strides = array<i32: 2, 1>} : memref<60x32xf32, #tpu.memory_space<vmem>>, vector<8x32xf32>
    %120 = vector.extract_strided_slice %118 {offsets = [0, 0], sizes = [1, 32], strides = [1, 1]} : vector<5x32xf32> to vector<1x32xf32>
    %121 = vector.broadcast %120 : vector<1x32xf32> to vector<8x32xf32>
    %122 = arith.mulf %121, %119 : vector<8x32xf32>
    %c21 = arith.constant 21 : index
    %c0_65 = arith.constant 0 : index
    %123 = tpu.strided_load %arg22[%c21, %c0_65] {strides = array<i32: 2, 1>} : memref<60x32xf32, #tpu.memory_space<vmem>>, vector<8x32xf32>
    %124 = vector.extract_strided_slice %118 {offsets = [1, 0], sizes = [1, 32], strides = [1, 1]} : vector<5x32xf32> to vector<1x32xf32>
    %125 = vector.broadcast %124 : vector<1x32xf32> to vector<8x32xf32>
    %126 = arith.mulf %125, %123 : vector<8x32xf32>
    %c22_66 = arith.constant 22 : index
    %c0_67 = arith.constant 0 : index
    %127 = tpu.strided_load %arg22[%c22_66, %c0_67] {strides = array<i32: 2, 1>} : memref<60x32xf32, #tpu.memory_space<vmem>>, vector<8x32xf32>
    %128 = vector.extract_strided_slice %118 {offsets = [2, 0], sizes = [1, 32], strides = [1, 1]} : vector<5x32xf32> to vector<1x32xf32>
    %129 = vector.broadcast %128 : vector<1x32xf32> to vector<8x32xf32>
    %130 = arith.mulf %129, %127 : vector<8x32xf32>
    %c23 = arith.constant 23 : index
    %c0_68 = arith.constant 0 : index
    %131 = tpu.strided_load %arg22[%c23, %c0_68] {strides = array<i32: 2, 1>} : memref<60x32xf32, #tpu.memory_space<vmem>>, vector<8x32xf32>
    %132 = vector.extract_strided_slice %118 {offsets = [3, 0], sizes = [1, 32], strides = [1, 1]} : vector<5x32xf32> to vector<1x32xf32>
    %133 = vector.broadcast %132 : vector<1x32xf32> to vector<8x32xf32>
    %134 = arith.mulf %133, %131 : vector<8x32xf32>
    %c24 = arith.constant 24 : index
    %c0_69 = arith.constant 0 : index
    %135 = tpu.strided_load %arg22[%c24, %c0_69] {strides = array<i32: 2, 1>} : memref<60x32xf32, #tpu.memory_space<vmem>>, vector<8x32xf32>
    %136 = vector.extract_strided_slice %118 {offsets = [4, 0], sizes = [1, 32], strides = [1, 1]} : vector<5x32xf32> to vector<1x32xf32>
    %137 = vector.broadcast %136 : vector<1x32xf32> to vector<8x32xf32>
    %138 = arith.mulf %137, %135 : vector<8x32xf32>
    %139 = arith.addf %122, %126 : vector<8x32xf32>
    %140 = arith.addf %139, %130 : vector<8x32xf32>
    %141 = arith.addf %140, %134 : vector<8x32xf32>
    %142 = arith.addf %141, %138 : vector<8x32xf32>
    %c1_70 = arith.constant 1 : index
    %c0_71 = arith.constant 0 : index
    %c0_72 = arith.constant 0 : index
    %143 = vector.load %arg8[%c1_70, %c0_71, %c0_72] : memref<4x1x32xf32, #tpu.memory_space<vmem>>, vector<1x1x32xf32>
    %144 = vector.shape_cast %143 : vector<1x1x32xf32> to vector<1x32xf32>
    %145 = vector.broadcast %144 : vector<1x32xf32> to vector<8x32xf32>
    %146 = arith.addf %142, %145 : vector<8x32xf32>
    %c1_73 = arith.constant 1 : index
    %c0_74 = arith.constant 0 : index
    %c0_75 = arith.constant 0 : index
    %147 = vector.load %arg9[%c1_73, %c0_74, %c0_75] : memref<4x1x32xf32, #tpu.memory_space<vmem>>, vector<1x1x32xf32>
    %148 = vector.shape_cast %147 : vector<1x1x32xf32> to vector<1x32xf32>
    %c1_76 = arith.constant 1 : index
    %c0_77 = arith.constant 0 : index
    %c0_78 = arith.constant 0 : index
    %149 = vector.load %arg10[%c1_76, %c0_77, %c0_78] : memref<4x1x32xf32, #tpu.memory_space<vmem>>, vector<1x1x32xf32>
    %150 = vector.shape_cast %149 : vector<1x1x32xf32> to vector<1x32xf32>
    %cst_79 = arith.constant dense<0.000000e+00> : vector<32xf32>
    %151 = vector.multi_reduction <add>, %146, %cst_79 [0] : vector<8x32xf32> to vector<32xf32>
    %152 = vector.shape_cast %151 : vector<32xf32> to vector<1x32xf32>
    %153 = arith.mulf %146, %146 : vector<8x32xf32>
    %cst_80 = arith.constant dense<0.000000e+00> : vector<32xf32>
    %154 = vector.multi_reduction <add>, %153, %cst_80 [0] : vector<8x32xf32> to vector<32xf32>
    %155 = vector.shape_cast %154 : vector<32xf32> to vector<1x32xf32>
    %156 = vector.shape_cast %152 : vector<1x32xf32> to vector<1x1x32xf32>
    %cst_81 = arith.constant dense<0.000000e+00> : vector<1xf32>
    %157 = vector.multi_reduction <add>, %156, %cst_81 [1, 2] : vector<1x1x32xf32> to vector<1xf32>
    %158 = vector.shape_cast %157 : vector<1xf32> to vector<1x1x1xf32>
    %159 = vector.extract %158[0, 0, 0] : f32 from vector<1x1x1xf32>
    %cst_82 = arith.constant 3.906250e-03 : f32
    %160 = arith.mulf %159, %cst_82 : f32
    %161 = vector.shape_cast %155 : vector<1x32xf32> to vector<1x1x32xf32>
    %cst_83 = arith.constant dense<0.000000e+00> : vector<1xf32>
    %162 = vector.multi_reduction <add>, %161, %cst_83 [1, 2] : vector<1x1x32xf32> to vector<1xf32>
    %163 = vector.shape_cast %162 : vector<1xf32> to vector<1x1x1xf32>
    %164 = vector.extract %163[0, 0, 0] : f32 from vector<1x1x1xf32>
    %cst_84 = arith.constant 3.906250e-03 : f32
    %165 = arith.mulf %164, %cst_84 : f32
    %166 = arith.mulf %160, %160 : f32
    %167 = arith.subf %165, %166 : f32
    %cst_85 = arith.constant 0.000000e+00 : f32
    %168 = arith.maximumf %167, %cst_85 : f32
    %169 = vector.broadcast %160 : f32 to vector<8x32xf32>
    %170 = arith.subf %146, %169 : vector<8x32xf32>
    %cst_86 = arith.constant 9.99999993E-9 : f32
    %171 = arith.addf %168, %cst_86 : f32
    %172 = math.rsqrt %171 : f32
    %173 = vector.broadcast %172 : f32 to vector<8x32xf32>
    %174 = arith.mulf %170, %173 : vector<8x32xf32>
    %175 = vector.broadcast %148 : vector<1x32xf32> to vector<8x32xf32>
    %176 = arith.mulf %174, %175 : vector<8x32xf32>
    %177 = vector.broadcast %150 : vector<1x32xf32> to vector<8x32xf32>
    %178 = arith.addf %176, %177 : vector<8x32xf32>
    %c42 = arith.constant 42 : index
    %c0_87 = arith.constant 0 : index
    %179 = vector.load %arg22[%c42, %c0_87] : memref<60x32xf32, #tpu.memory_space<vmem>>, vector<8x32xf32>
    tpu.vector_store %arg22[%c42, %c0_87], %178 {strides = array<i32>} : memref<60x32xf32, #tpu.memory_space<vmem>>, vector<8x32xf32>,
    %c2_88 = arith.constant 2 : index
    %c0_89 = arith.constant 0 : index
    %c0_90 = arith.constant 0 : index
    %180 = vector.load %arg7[%c2_88, %c0_89, %c0_90] : memref<4x5x32xf32, #tpu.memory_space<vmem>>, vector<1x5x32xf32>
    %181 = vector.shape_cast %180 : vector<1x5x32xf32> to vector<5x32xf32>
    %c40_91 = arith.constant 40 : index
    %c0_92 = arith.constant 0 : index
    %182 = tpu.strided_load %arg22[%c40_91, %c0_92] {strides = array<i32: 2, 1>} : memref<60x32xf32, #tpu.memory_space<vmem>>, vector<4x32xf32>
    %183 = vector.extract_strided_slice %181 {offsets = [0, 0], sizes = [1, 32], strides = [1, 1]} : vector<5x32xf32> to vector<1x32xf32>
    %184 = vector.broadcast %183 : vector<1x32xf32> to vector<4x32xf32>
    %185 = arith.mulf %184, %182 : vector<4x32xf32>
    %c41 = arith.constant 41 : index
    %c0_93 = arith.constant 0 : index
    %186 = tpu.strided_load %arg22[%c41, %c0_93] {strides = array<i32: 2, 1>} : memref<60x32xf32, #tpu.memory_space<vmem>>, vector<4x32xf32>
    %187 = vector.extract_strided_slice %181 {offsets = [1, 0], sizes = [1, 32], strides = [1, 1]} : vector<5x32xf32> to vector<1x32xf32>
    %188 = vector.broadcast %187 : vector<1x32xf32> to vector<4x32xf32>
    %189 = arith.mulf %188, %186 : vector<4x32xf32>
    %c42_94 = arith.constant 42 : index
    %c0_95 = arith.constant 0 : index
    %190 = tpu.strided_load %arg22[%c42_94, %c0_95] {strides = array<i32: 2, 1>} : memref<60x32xf32, #tpu.memory_space<vmem>>, vector<4x32xf32>
    %191 = vector.extract_strided_slice %181 {offsets = [2, 0], sizes = [1, 32], strides = [1, 1]} : vector<5x32xf32> to vector<1x32xf32>
    %192 = vector.broadcast %191 : vector<1x32xf32> to vector<4x32xf32>
    %193 = arith.mulf %192, %190 : vector<4x32xf32>
    %c43 = arith.constant 43 : index
    %c0_96 = arith.constant 0 : index
    %194 = tpu.strided_load %arg22[%c43, %c0_96] {strides = array<i32: 2, 1>} : memref<60x32xf32, #tpu.memory_space<vmem>>, vector<4x32xf32>
    %195 = vector.extract_strided_slice %181 {offsets = [3, 0], sizes = [1, 32], strides = [1, 1]} : vector<5x32xf32> to vector<1x32xf32>
    %196 = vector.broadcast %195 : vector<1x32xf32> to vector<4x32xf32>
    %197 = arith.mulf %196, %194 : vector<4x32xf32>
    %c44 = arith.constant 44 : index
    %c0_97 = arith.constant 0 : index
    %198 = tpu.strided_load %arg22[%c44, %c0_97] {strides = array<i32: 2, 1>} : memref<60x32xf32, #tpu.memory_space<vmem>>, vector<4x32xf32>
    %199 = vector.extract_strided_slice %181 {offsets = [4, 0], sizes = [1, 32], strides = [1, 1]} : vector<5x32xf32> to vector<1x32xf32>
    %200 = vector.broadcast %199 : vector<1x32xf32> to vector<4x32xf32>
    %201 = arith.mulf %200, %198 : vector<4x32xf32>
    %202 = arith.addf %185, %189 : vector<4x32xf32>
    %203 = arith.addf %202, %193 : vector<4x32xf32>
    %204 = arith.addf %203, %197 : vector<4x32xf32>
    %205 = arith.addf %204, %201 : vector<4x32xf32>
    %c2_98 = arith.constant 2 : index
    %c0_99 = arith.constant 0 : index
    %c0_100 = arith.constant 0 : index
    %206 = vector.load %arg8[%c2_98, %c0_99, %c0_100] : memref<4x1x32xf32, #tpu.memory_space<vmem>>, vector<1x1x32xf32>
    %207 = vector.shape_cast %206 : vector<1x1x32xf32> to vector<1x32xf32>
    %208 = vector.broadcast %207 : vector<1x32xf32> to vector<4x32xf32>
    %209 = arith.addf %205, %208 : vector<4x32xf32>
    %c2_101 = arith.constant 2 : index
    %c0_102 = arith.constant 0 : index
    %c0_103 = arith.constant 0 : index
    %210 = vector.load %arg9[%c2_101, %c0_102, %c0_103] : memref<4x1x32xf32, #tpu.memory_space<vmem>>, vector<1x1x32xf32>
    %211 = vector.shape_cast %210 : vector<1x1x32xf32> to vector<1x32xf32>
    %c2_104 = arith.constant 2 : index
    %c0_105 = arith.constant 0 : index
    %c0_106 = arith.constant 0 : index
    %212 = vector.load %arg10[%c2_104, %c0_105, %c0_106] : memref<4x1x32xf32, #tpu.memory_space<vmem>>, vector<1x1x32xf32>
    %213 = vector.shape_cast %212 : vector<1x1x32xf32> to vector<1x32xf32>
    %cst_107 = arith.constant dense<0.000000e+00> : vector<32xf32>
    %214 = vector.multi_reduction <add>, %209, %cst_107 [0] : vector<4x32xf32> to vector<32xf32>
    %215 = vector.shape_cast %214 : vector<32xf32> to vector<1x32xf32>
    %216 = arith.mulf %209, %209 : vector<4x32xf32>
    %cst_108 = arith.constant dense<0.000000e+00> : vector<32xf32>
    %217 = vector.multi_reduction <add>, %216, %cst_108 [0] : vector<4x32xf32> to vector<32xf32>
    %218 = vector.shape_cast %217 : vector<32xf32> to vector<1x32xf32>
    %219 = vector.shape_cast %215 : vector<1x32xf32> to vector<1x1x32xf32>
    %cst_109 = arith.constant dense<0.000000e+00> : vector<1xf32>
    %220 = vector.multi_reduction <add>, %219, %cst_109 [1, 2] : vector<1x1x32xf32> to vector<1xf32>
    %221 = vector.shape_cast %220 : vector<1xf32> to vector<1x1x1xf32>
    %222 = vector.extract %221[0, 0, 0] : f32 from vector<1x1x1xf32>
    %cst_110 = arith.constant 7.812500e-03 : f32
    %223 = arith.mulf %222, %cst_110 : f32
    %224 = vector.shape_cast %218 : vector<1x32xf32> to vector<1x1x32xf32>
    %cst_111 = arith.constant dense<0.000000e+00> : vector<1xf32>
    %225 = vector.multi_reduction <add>, %224, %cst_111 [1, 2] : vector<1x1x32xf32> to vector<1xf32>
    %226 = vector.shape_cast %225 : vector<1xf32> to vector<1x1x1xf32>
    %227 = vector.extract %226[0, 0, 0] : f32 from vector<1x1x1xf32>
    %cst_112 = arith.constant 7.812500e-03 : f32
    %228 = arith.mulf %227, %cst_112 : f32
    %229 = arith.mulf %223, %223 : f32
    %230 = arith.subf %228, %229 : f32
    %cst_113 = arith.constant 0.000000e+00 : f32
    %231 = arith.maximumf %230, %cst_113 : f32
    %232 = vector.broadcast %223 : f32 to vector<4x32xf32>
    %233 = arith.subf %209, %232 : vector<4x32xf32>
    %cst_114 = arith.constant 9.99999993E-9 : f32
    %234 = arith.addf %231, %cst_114 : f32
    %235 = math.rsqrt %234 : f32
    %236 = vector.broadcast %235 : f32 to vector<4x32xf32>
    %237 = arith.mulf %233, %236 : vector<4x32xf32>
    %238 = vector.broadcast %211 : vector<1x32xf32> to vector<4x32xf32>
    %239 = arith.mulf %237, %238 : vector<4x32xf32>
    %240 = vector.broadcast %213 : vector<1x32xf32> to vector<4x32xf32>
    %241 = arith.addf %239, %240 : vector<4x32xf32>
    %c54 = arith.constant 54 : index
    %c0_115 = arith.constant 0 : index
    %242 = vector.load %arg22[%c54, %c0_115] : memref<60x32xf32, #tpu.memory_space<vmem>>, vector<4x32xf32>
    tpu.vector_store %arg22[%c54, %c0_115], %241 {strides = array<i32>} : memref<60x32xf32, #tpu.memory_space<vmem>>, vector<4x32xf32>,
    %c3_116 = arith.constant 3 : index
    %c0_117 = arith.constant 0 : index
    %c0_118 = arith.constant 0 : index
    %243 = vector.load %arg7[%c3_116, %c0_117, %c0_118] : memref<4x5x32xf32, #tpu.memory_space<vmem>>, vector<1x5x32xf32>
    %244 = vector.shape_cast %243 : vector<1x5x32xf32> to vector<5x32xf32>
    %c52_119 = arith.constant 52 : index
    %c0_120 = arith.constant 0 : index
    %245 = tpu.strided_load %arg22[%c52_119, %c0_120] {strides = array<i32: 2, 1>} : memref<60x32xf32, #tpu.memory_space<vmem>>, vector<2x32xf32>
    %246 = vector.extract_strided_slice %244 {offsets = [0, 0], sizes = [1, 32], strides = [1, 1]} : vector<5x32xf32> to vector<1x32xf32>
    %247 = vector.broadcast %246 : vector<1x32xf32> to vector<2x32xf32>
    %248 = arith.mulf %247, %245 : vector<2x32xf32>
    %c53 = arith.constant 53 : index
    %c0_121 = arith.constant 0 : index
    %249 = tpu.strided_load %arg22[%c53, %c0_121] {strides = array<i32: 2, 1>} : memref<60x32xf32, #tpu.memory_space<vmem>>, vector<2x32xf32>
    %250 = vector.extract_strided_slice %244 {offsets = [1, 0], sizes = [1, 32], strides = [1, 1]} : vector<5x32xf32> to vector<1x32xf32>
    %251 = vector.broadcast %250 : vector<1x32xf32> to vector<2x32xf32>
    %252 = arith.mulf %251, %249 : vector<2x32xf32>
    %c54_122 = arith.constant 54 : index
    %c0_123 = arith.constant 0 : index
    %253 = tpu.strided_load %arg22[%c54_122, %c0_123] {strides = array<i32: 2, 1>} : memref<60x32xf32, #tpu.memory_space<vmem>>, vector<2x32xf32>
    %254 = vector.extract_strided_slice %244 {offsets = [2, 0], sizes = [1, 32], strides = [1, 1]} : vector<5x32xf32> to vector<1x32xf32>
    %255 = vector.broadcast %254 : vector<1x32xf32> to vector<2x32xf32>
    %256 = arith.mulf %255, %253 : vector<2x32xf32>
    %c55 = arith.constant 55 : index
    %c0_124 = arith.constant 0 : index
    %257 = tpu.strided_load %arg22[%c55, %c0_124] {strides = array<i32: 2, 1>} : memref<60x32xf32, #tpu.memory_space<vmem>>, vector<2x32xf32>
    %258 = vector.extract_strided_slice %244 {offsets = [3, 0], sizes = [1, 32], strides = [1, 1]} : vector<5x32xf32> to vector<1x32xf32>
    %259 = vector.broadcast %258 : vector<1x32xf32> to vector<2x32xf32>
    %260 = arith.mulf %259, %257 : vector<2x32xf32>
    %c56 = arith.constant 56 : index
    %c0_125 = arith.constant 0 : index
    %261 = tpu.strided_load %arg22[%c56, %c0_125] {strides = array<i32: 2, 1>} : memref<60x32xf32, #tpu.memory_space<vmem>>, vector<2x32xf32>
    %262 = vector.extract_strided_slice %244 {offsets = [4, 0], sizes = [1, 32], strides = [1, 1]} : vector<5x32xf32> to vector<1x32xf32>
    %263 = vector.broadcast %262 : vector<1x32xf32> to vector<2x32xf32>
    %264 = arith.mulf %263, %261 : vector<2x32xf32>
    %265 = arith.addf %248, %252 : vector<2x32xf32>
    %266 = arith.addf %265, %256 : vector<2x32xf32>
    %267 = arith.addf %266, %260 : vector<2x32xf32>
    %268 = arith.addf %267, %264 : vector<2x32xf32>
    %c3_126 = arith.constant 3 : index
    %c0_127 = arith.constant 0 : index
    %c0_128 = arith.constant 0 : index
    %269 = vector.load %arg8[%c3_126, %c0_127, %c0_128] : memref<4x1x32xf32, #tpu.memory_space<vmem>>, vector<1x1x32xf32>
    %270 = vector.shape_cast %269 : vector<1x1x32xf32> to vector<1x32xf32>
    %271 = vector.broadcast %270 : vector<1x32xf32> to vector<2x32xf32>
    %272 = arith.addf %268, %271 : vector<2x32xf32>
    %c3_129 = arith.constant 3 : index
    %c0_130 = arith.constant 0 : index
    %c0_131 = arith.constant 0 : index
    %273 = vector.load %arg9[%c3_129, %c0_130, %c0_131] : memref<4x1x32xf32, #tpu.memory_space<vmem>>, vector<1x1x32xf32>
    %274 = vector.shape_cast %273 : vector<1x1x32xf32> to vector<1x32xf32>
    %c3_132 = arith.constant 3 : index
    %c0_133 = arith.constant 0 : index
    %c0_134 = arith.constant 0 : index
    %275 = vector.load %arg10[%c3_132, %c0_133, %c0_134] : memref<4x1x32xf32, #tpu.memory_space<vmem>>, vector<1x1x32xf32>
    %276 = vector.shape_cast %275 : vector<1x1x32xf32> to vector<1x32xf32>
    %cst_135 = arith.constant dense<0.000000e+00> : vector<32xf32>
    %277 = vector.multi_reduction <add>, %272, %cst_135 [0] : vector<2x32xf32> to vector<32xf32>
    %278 = vector.shape_cast %277 : vector<32xf32> to vector<1x32xf32>
    %279 = arith.mulf %272, %272 : vector<2x32xf32>
    %cst_136 = arith.constant dense<0.000000e+00> : vector<32xf32>
    %280 = vector.multi_reduction <add>, %279, %cst_136 [0] : vector<2x32xf32> to vector<32xf32>
    %281 = vector.shape_cast %280 : vector<32xf32> to vector<1x32xf32>
    %282 = vector.shape_cast %278 : vector<1x32xf32> to vector<1x1x32xf32>
    %cst_137 = arith.constant dense<0.000000e+00> : vector<1xf32>
    %283 = vector.multi_reduction <add>, %282, %cst_137 [1, 2] : vector<1x1x32xf32> to vector<1xf32>
    %284 = vector.shape_cast %283 : vector<1xf32> to vector<1x1x1xf32>
    %285 = vector.extract %284[0, 0, 0] : f32 from vector<1x1x1xf32>
    %cst_138 = arith.constant 1.562500e-02 : f32
    %286 = arith.mulf %285, %cst_138 : f32
    %287 = vector.shape_cast %281 : vector<1x32xf32> to vector<1x1x32xf32>
    %cst_139 = arith.constant dense<0.000000e+00> : vector<1xf32>
    %288 = vector.multi_reduction <add>, %287, %cst_139 [1, 2] : vector<1x1x32xf32> to vector<1xf32>
    %289 = vector.shape_cast %288 : vector<1xf32> to vector<1x1x1xf32>
    %290 = vector.extract %289[0, 0, 0] : f32 from vector<1x1x1xf32>
    %cst_140 = arith.constant 1.562500e-02 : f32
    %291 = arith.mulf %290, %cst_140 : f32
    %292 = arith.mulf %286, %286 : f32
    %293 = arith.subf %291, %292 : f32
    %cst_141 = arith.constant 0.000000e+00 : f32
    %294 = arith.maximumf %293, %cst_141 : f32
    %295 = vector.broadcast %286 : f32 to vector<2x32xf32>
    %296 = arith.subf %272, %295 : vector<2x32xf32>
    %cst_142 = arith.constant 9.99999993E-9 : f32
    %297 = arith.addf %294, %cst_142 : f32
    %298 = math.rsqrt %297 : f32
    %299 = vector.broadcast %298 : f32 to vector<2x32xf32>
    %300 = arith.mulf %296, %299 : vector<2x32xf32>
    %301 = vector.broadcast %274 : vector<1x32xf32> to vector<2x32xf32>
    %302 = arith.mulf %300, %301 : vector<2x32xf32>
    %303 = vector.broadcast %276 : vector<1x32xf32> to vector<2x32xf32>
    %304 = arith.addf %302, %303 : vector<2x32xf32>
    %c0_143 = arith.constant 0 : index
    %c0_144 = arith.constant 0 : index
    %305 = tpu.strided_load %arg22[%c0_143, %c0_144] {strides = array<i32: 2, 1>} : memref<60x32xf32, #tpu.memory_space<vmem>>, vector<2x32xf32>
    tpu.strided_store %arg22[%c0_143, %c0_144], %304 {strides = array<i32: 2, 1>} : memref<60x32xf32, #tpu.memory_space<vmem>>, vector<2x32xf32>
    %c1_145 = arith.constant 1 : index
    %c0_146 = arith.constant 0 : index
    %306 = tpu.strided_load %arg22[%c1_145, %c0_146] {strides = array<i32: 2, 1>} : memref<60x32xf32, #tpu.memory_space<vmem>>, vector<2x32xf32>
    tpu.strided_store %arg22[%c1_145, %c0_146], %304 {strides = array<i32: 2, 1>} : memref<60x32xf32, #tpu.memory_space<vmem>>, vector<2x32xf32>
    %c54_147 = arith.constant 54 : index
    %c0_148 = arith.constant 0 : index
    %307 = vector.load %arg22[%c54_147, %c0_148] : memref<60x32xf32, #tpu.memory_space<vmem>>, vector<4x32xf32>
    %c0_149 = arith.constant 0 : index
    %c0_150 = arith.constant 0 : index
    %308 = vector.load %arg22[%c0_149, %c0_150] : memref<60x32xf32, #tpu.memory_space<vmem>>, vector<4x32xf32>
    %309 = arith.addf %307, %308 : vector<4x32xf32>
    %c0_151 = arith.constant 0 : index
    %c0_152 = arith.constant 0 : index
    %310 = tpu.strided_load %arg22[%c0_151, %c0_152] {strides = array<i32: 2, 1>} : memref<60x32xf32, #tpu.memory_space<vmem>>, vector<4x32xf32>
    tpu.strided_store %arg22[%c0_151, %c0_152], %309 {strides = array<i32: 2, 1>} : memref<60x32xf32, #tpu.memory_space<vmem>>, vector<4x32xf32>
    %c1_153 = arith.constant 1 : index
    %c0_154 = arith.constant 0 : index
    %311 = tpu.strided_load %arg22[%c1_153, %c0_154] {strides = array<i32: 2, 1>} : memref<60x32xf32, #tpu.memory_space<vmem>>, vector<4x32xf32>
    tpu.strided_store %arg22[%c1_153, %c0_154], %309 {strides = array<i32: 2, 1>} : memref<60x32xf32, #tpu.memory_space<vmem>>, vector<4x32xf32>
    %c42_155 = arith.constant 42 : index
    %c0_156 = arith.constant 0 : index
    %312 = vector.load %arg22[%c42_155, %c0_156] : memref<60x32xf32, #tpu.memory_space<vmem>>, vector<8x32xf32>
    %c0_157 = arith.constant 0 : index
    %c0_158 = arith.constant 0 : index
    %313 = vector.load %arg22[%c0_157, %c0_158] : memref<60x32xf32, #tpu.memory_space<vmem>>, vector<8x32xf32>
    %314 = arith.addf %312, %313 : vector<8x32xf32>
    %c0_159 = arith.constant 0 : index
    %c0_160 = arith.constant 0 : index
    %315 = tpu.strided_load %arg22[%c0_159, %c0_160] {strides = array<i32: 2, 1>} : memref<60x32xf32, #tpu.memory_space<vmem>>, vector<8x32xf32>
    tpu.strided_store %arg22[%c0_159, %c0_160], %314 {strides = array<i32: 2, 1>} : memref<60x32xf32, #tpu.memory_space<vmem>>, vector<8x32xf32>
    %c1_161 = arith.constant 1 : index
    %c0_162 = arith.constant 0 : index
    %316 = tpu.strided_load %arg22[%c1_161, %c0_162] {strides = array<i32: 2, 1>} : memref<60x32xf32, #tpu.memory_space<vmem>>, vector<8x32xf32>
    tpu.strided_store %arg22[%c1_161, %c0_162], %314 {strides = array<i32: 2, 1>} : memref<60x32xf32, #tpu.memory_space<vmem>>, vector<8x32xf32>
    %c22_163 = arith.constant 22 : index
    %c0_164 = arith.constant 0 : index
    %317 = vector.load %arg22[%c22_163, %c0_164] : memref<60x32xf32, #tpu.memory_space<vmem>>, vector<16x32xf32>
    %c0_165 = arith.constant 0 : index
    %c0_166 = arith.constant 0 : index
    %318 = vector.load %arg22[%c0_165, %c0_166] : memref<60x32xf32, #tpu.memory_space<vmem>>, vector<16x32xf32>
    %319 = arith.addf %317, %318 : vector<16x32xf32>
    %c0_167 = arith.constant 0 : index
    %c0_168 = arith.constant 0 : index
    %320 = vector.load %arg11[%c0_167, %c0_168] : memref<1x32xf32, #tpu.memory_space<vmem>>, vector<1x32xf32>
    %c0_169 = arith.constant 0 : index
    %c0_170 = arith.constant 0 : index
    %321 = vector.load %arg12[%c0_169, %c0_170] : memref<1x32xf32, #tpu.memory_space<vmem>>, vector<1x32xf32>
    %c0_171 = arith.constant 0 : index
    %c0_172 = arith.constant 0 : index
    %322 = vector.load %arg13[%c0_171, %c0_172] : memref<1x32xf32, #tpu.memory_space<vmem>>, vector<1x32xf32>
    %cst_173 = arith.constant dense<0.000000e+00> : vector<32xf32>
    %323 = vector.multi_reduction <add>, %319, %cst_173 [0] : vector<16x32xf32> to vector<32xf32>
    %324 = vector.shape_cast %323 : vector<32xf32> to vector<1x32xf32>
    %325 = arith.mulf %319, %319 : vector<16x32xf32>
    %cst_174 = arith.constant dense<0.000000e+00> : vector<32xf32>
    %326 = vector.multi_reduction <add>, %325, %cst_174 [0] : vector<16x32xf32> to vector<32xf32>
    %327 = vector.shape_cast %326 : vector<32xf32> to vector<1x32xf32>
    %328 = vector.shape_cast %324 : vector<1x32xf32> to vector<1x1x32xf32>
    %cst_175 = arith.constant dense<0.000000e+00> : vector<1xf32>
    %329 = vector.multi_reduction <add>, %328, %cst_175 [1, 2] : vector<1x1x32xf32> to vector<1xf32>
    %330 = vector.shape_cast %329 : vector<1xf32> to vector<1x1x1xf32>
    %331 = vector.extract %330[0, 0, 0] : f32 from vector<1x1x1xf32>
    %cst_176 = arith.constant 0.001953125 : f32
    %332 = arith.mulf %331, %cst_176 : f32
    %333 = vector.shape_cast %327 : vector<1x32xf32> to vector<1x1x32xf32>
    %cst_177 = arith.constant dense<0.000000e+00> : vector<1xf32>
    %334 = vector.multi_reduction <add>, %333, %cst_177 [1, 2] : vector<1x1x32xf32> to vector<1xf32>
    %335 = vector.shape_cast %334 : vector<1xf32> to vector<1x1x1xf32>
    %336 = vector.extract %335[0, 0, 0] : f32 from vector<1x1x1xf32>
    %cst_178 = arith.constant 0.001953125 : f32
    %337 = arith.mulf %336, %cst_178 : f32
    %338 = arith.mulf %332, %332 : f32
    %339 = arith.subf %337, %338 : f32
    %cst_179 = arith.constant 0.000000e+00 : f32
    %340 = arith.maximumf %339, %cst_179 : f32
    %341 = vector.broadcast %332 : f32 to vector<16x32xf32>
    %342 = arith.subf %319, %341 : vector<16x32xf32>
    %cst_180 = arith.constant 9.99999993E-9 : f32
    %343 = arith.addf %340, %cst_180 : f32
    %344 = math.rsqrt %343 : f32
    %345 = vector.broadcast %344 : f32 to vector<16x32xf32>
    %346 = arith.mulf %342, %345 : vector<16x32xf32>
    %347 = vector.broadcast %320 : vector<1x32xf32> to vector<16x32xf32>
    %348 = arith.mulf %346, %347 : vector<16x32xf32>
    %349 = vector.broadcast %321 : vector<1x32xf32> to vector<16x32xf32>
    %350 = arith.addf %348, %349 : vector<16x32xf32>
    %cst_181 = arith.constant 0.000000e+00 : f32
    %351 = vector.broadcast %cst_181 : f32 to vector<16x32xf32>
    %352 = arith.cmpf oge, %350, %351 : vector<16x32xf32>
    %353 = vector.broadcast %322 : vector<1x32xf32> to vector<16x32xf32>
    %354 = arith.mulf %353, %350 : vector<16x32xf32>
    %355 = arith.select %352, %350, %354 : vector<16x32xi1>, vector<16x32xf32>
    %c0_182 = arith.constant 0 : index
    %c0_183 = arith.constant 0 : index
    %356 = vector.load %arg14[%c0_182, %c0_183] : memref<32x8xbf16, #tpu.memory_space<vmem>>, vector<32x8xbf16>
    %357 = arith.truncf %355 : vector<16x32xf32> to vector<16x32xbf16>
    %cst_184 = arith.constant dense<0.000000e+00> : vector<16x8xf32>
    %358 = tpu.matmul %357, %356, %cst_184 {dimension_numbers = #tpu.dot_dimension_numbers<[1], [0], [0], [1], [0, 0, 1, 1], [], []>} : vector<16x32xbf16>, vector<32x8xbf16>, vector<16x8xf32> -> vector<16x8xf32>
    %c0_185 = arith.constant 0 : index
    %c0_186 = arith.constant 0 : index
    %359 = vector.load %arg15[%c0_185, %c0_186] : memref<1x8xf32, #tpu.memory_space<vmem>>, vector<1x8xf32>
    %360 = vector.broadcast %359 : vector<1x8xf32> to vector<16x8xf32>
    %361 = arith.addf %358, %360 : vector<16x8xf32>
    %c0_187 = arith.constant 0 : index
    %c0_188 = arith.constant 0 : index
    %362 = vector.load %arg16[%c0_187, %c0_188] : memref<1x8xf32, #tpu.memory_space<vmem>>, vector<1x8xf32>
    %c0_189 = arith.constant 0 : index
    %c0_190 = arith.constant 0 : index
    %363 = vector.load %arg17[%c0_189, %c0_190] : memref<1x8xf32, #tpu.memory_space<vmem>>, vector<1x8xf32>
    %cst_191 = arith.constant dense<0.000000e+00> : vector<8xf32>
    %364 = vector.multi_reduction <add>, %361, %cst_191 [0] : vector<16x8xf32> to vector<8xf32>
    %365 = vector.shape_cast %364 : vector<8xf32> to vector<1x8xf32>
    %366 = arith.mulf %361, %361 : vector<16x8xf32>
    %cst_192 = arith.constant dense<0.000000e+00> : vector<8xf32>
    %367 = vector.multi_reduction <add>, %366, %cst_192 [0] : vector<16x8xf32> to vector<8xf32>
    %368 = vector.shape_cast %367 : vector<8xf32> to vector<1x8xf32>
    %369 = vector.shape_cast %365 : vector<1x8xf32> to vector<1x1x8xf32>
    %cst_193 = arith.constant dense<0.000000e+00> : vector<1xf32>
    %370 = vector.multi_reduction <add>, %369, %cst_193 [1, 2] : vector<1x1x8xf32> to vector<1xf32>
    %371 = vector.shape_cast %370 : vector<1xf32> to vector<1x1x1xf32>
    %372 = vector.extract %371[0, 0, 0] : f32 from vector<1x1x1xf32>
    %cst_194 = arith.constant 7.812500e-03 : f32
    %373 = arith.mulf %372, %cst_194 : f32
    %374 = vector.shape_cast %368 : vector<1x8xf32> to vector<1x1x8xf32>
    %cst_195 = arith.constant dense<0.000000e+00> : vector<1xf32>
    %375 = vector.multi_reduction <add>, %374, %cst_195 [1, 2] : vector<1x1x8xf32> to vector<1xf32>
    %376 = vector.shape_cast %375 : vector<1xf32> to vector<1x1x1xf32>
    %377 = vector.extract %376[0, 0, 0] : f32 from vector<1x1x1xf32>
    %cst_196 = arith.constant 7.812500e-03 : f32
    %378 = arith.mulf %377, %cst_196 : f32
    %379 = arith.mulf %373, %373 : f32
    %380 = arith.subf %378, %379 : f32
    %cst_197 = arith.constant 0.000000e+00 : f32
    %381 = arith.maximumf %380, %cst_197 : f32
    %382 = vector.broadcast %373 : f32 to vector<16x8xf32>
    %383 = arith.subf %361, %382 : vector<16x8xf32>
    %cst_198 = arith.constant 9.99999993E-9 : f32
    %384 = arith.addf %381, %cst_198 : f32
    %385 = math.rsqrt %384 : f32
    %386 = vector.broadcast %385 : f32 to vector<16x8xf32>
    %387 = arith.mulf %383, %386 : vector<16x8xf32>
    %388 = vector.broadcast %362 : vector<1x8xf32> to vector<16x8xf32>
    %389 = arith.mulf %387, %388 : vector<16x8xf32>
    %390 = vector.broadcast %363 : vector<1x8xf32> to vector<16x8xf32>
    %391 = arith.addf %389, %390 : vector<16x8xf32>
    %392 = arith.addf %391, %1 : vector<16x8xf32>
    %c0_199 = arith.constant 0 : index
    %c0_200 = arith.constant 0 : index
    %393 = vector.load %arg18[%c0_199, %c0_200] : memref<1x8xf32, #tpu.memory_space<vmem>>, vector<1x8xf32>
    %c0_201 = arith.constant 0 : index
    %c0_202 = arith.constant 0 : index
    %394 = vector.load %arg19[%c0_201, %c0_202] : memref<1x8xf32, #tpu.memory_space<vmem>>, vector<1x8xf32>
    %c0_203 = arith.constant 0 : index
    %c0_204 = arith.constant 0 : index
    %395 = vector.load %arg20[%c0_203, %c0_204] : memref<1x8xf32, #tpu.memory_space<vmem>>, vector<1x8xf32>
    %cst_205 = arith.constant dense<0.000000e+00> : vector<8xf32>
    %396 = vector.multi_reduction <add>, %392, %cst_205 [0] : vector<16x8xf32> to vector<8xf32>
    %397 = vector.shape_cast %396 : vector<8xf32> to vector<1x8xf32>
    %398 = arith.mulf %392, %392 : vector<16x8xf32>
    %cst_206 = arith.constant dense<0.000000e+00> : vector<8xf32>
    %399 = vector.multi_reduction <add>, %398, %cst_206 [0] : vector<16x8xf32> to vector<8xf32>
    %400 = vector.shape_cast %399 : vector<8xf32> to vector<1x8xf32>
    %401 = vector.shape_cast %397 : vector<1x8xf32> to vector<1x1x8xf32>
    %cst_207 = arith.constant dense<0.000000e+00> : vector<1xf32>
    %402 = vector.multi_reduction <add>, %401, %cst_207 [1, 2] : vector<1x1x8xf32> to vector<1xf32>
    %403 = vector.shape_cast %402 : vector<1xf32> to vector<1x1x1xf32>
    %404 = vector.extract %403[0, 0, 0] : f32 from vector<1x1x1xf32>
    %cst_208 = arith.constant 7.812500e-03 : f32
    %405 = arith.mulf %404, %cst_208 : f32
    %406 = vector.shape_cast %400 : vector<1x8xf32> to vector<1x1x8xf32>
    %cst_209 = arith.constant dense<0.000000e+00> : vector<1xf32>
    %407 = vector.multi_reduction <add>, %406, %cst_209 [1, 2] : vector<1x1x8xf32> to vector<1xf32>
    %408 = vector.shape_cast %407 : vector<1xf32> to vector<1x1x1xf32>
    %409 = vector.extract %408[0, 0, 0] : f32 from vector<1x1x1xf32>
    %cst_210 = arith.constant 7.812500e-03 : f32
    %410 = arith.mulf %409, %cst_210 : f32
    %411 = arith.mulf %405, %405 : f32
    %412 = arith.subf %410, %411 : f32
    %cst_211 = arith.constant 0.000000e+00 : f32
    %413 = arith.maximumf %412, %cst_211 : f32
    %414 = vector.broadcast %405 : f32 to vector<16x8xf32>
    %415 = arith.subf %392, %414 : vector<16x8xf32>
    %cst_212 = arith.constant 9.99999993E-9 : f32
    %416 = arith.addf %413, %cst_212 : f32
    %417 = math.rsqrt %416 : f32
    %418 = vector.broadcast %417 : f32 to vector<16x8xf32>
    %419 = arith.mulf %415, %418 : vector<16x8xf32>
    %420 = vector.broadcast %393 : vector<1x8xf32> to vector<16x8xf32>
    %421 = arith.mulf %419, %420 : vector<16x8xf32>
    %422 = vector.broadcast %394 : vector<1x8xf32> to vector<16x8xf32>
    %423 = arith.addf %421, %422 : vector<16x8xf32>
    %cst_213 = arith.constant 0.000000e+00 : f32
    %424 = vector.broadcast %cst_213 : f32 to vector<16x8xf32>
    %425 = arith.cmpf oge, %423, %424 : vector<16x8xf32>
    %426 = vector.broadcast %395 : vector<1x8xf32> to vector<16x8xf32>
    %427 = arith.mulf %426, %423 : vector<16x8xf32>
    %428 = arith.select %425, %423, %427 : vector<16x8xi1>, vector<16x8xf32>
    %c0_214 = arith.constant 0 : index
    %c0_215 = arith.constant 0 : index
    %c0_216 = arith.constant 0 : index
    %429 = vector.load %arg21[%c0_214, %c0_215, %c0_216] : memref<1x16x8xf32, #tpu.memory_space<vmem>>, vector<1x16x8xf32>
    %430 = vector.shape_cast %429 : vector<1x16x8xf32> to vector<16x8xf32>
    %431 = vector.shape_cast %428 : vector<16x8xf32> to vector<1x16x8xf32>
    tpu.vector_store %arg21[%c0_214, %c0_215, %c0_216], %431 {strides = array<i32>} : memref<1x16x8xf32, #tpu.memory_space<vmem>>, vector<1x16x8xf32>,
    return
  }
  func.func @transform_0(%arg0: i32) -> (i32, i32, i32) {
    %c0_i32 = arith.constant 0 : i32
    %c0_i32_0 = arith.constant 0 : i32
    %c0_i32_1 = arith.constant 0 : i32
    return %arg0, %c0_i32, %c0_i32_0 : i32, i32, i32
  }
  func.func @transform_1(%arg0: i32) -> (i32, i32) {
    %c0_i32 = arith.constant 0 : i32
    %c0_i32_0 = arith.constant 0 : i32
    %c0_i32_1 = arith.constant 0 : i32
    return %c0_i32, %c0_i32_0 : i32, i32
  }
  func.func @transform_2(%arg0: i32) -> (i32, i32) {
    %c0_i32 = arith.constant 0 : i32
    %c0_i32_0 = arith.constant 0 : i32
    %c0_i32_1 = arith.constant 0 : i32
    return %c0_i32, %c0_i32_0 : i32, i32
  }
  func.func @transform_3(%arg0: i32) -> (i32, i32) {
    %c0_i32 = arith.constant 0 : i32
    %c0_i32_0 = arith.constant 0 : i32
    %c0_i32_1 = arith.constant 0 : i32
    return %c0_i32, %c0_i32_0 : i32, i32
  }
  func.func @transform_4(%arg0: i32) -> (i32, i32) {
    %c0_i32 = arith.constant 0 : i32
    %c0_i32_0 = arith.constant 0 : i32
    %c0_i32_1 = arith.constant 0 : i32
    return %c0_i32, %c0_i32_0 : i32, i32
  }
  func.func @transform_5(%arg0: i32) -> (i32, i32) {
    %c0_i32 = arith.constant 0 : i32
    %c0_i32_0 = arith.constant 0 : i32
    %c0_i32_1 = arith.constant 0 : i32
    return %c0_i32, %c0_i32_0 : i32, i32
  }
  func.func @transform_6(%arg0: i32) -> (i32, i32, i32) {
    %c0_i32 = arith.constant 0 : i32
    %c0_i32_0 = arith.constant 0 : i32
    %c0_i32_1 = arith.constant 0 : i32
    %c0_i32_2 = arith.constant 0 : i32
    return %c0_i32, %c0_i32_0, %c0_i32_1 : i32, i32, i32
  }
  func.func @transform_7(%arg0: i32) -> (i32, i32, i32) {
    %c0_i32 = arith.constant 0 : i32
    %c0_i32_0 = arith.constant 0 : i32
    %c0_i32_1 = arith.constant 0 : i32
    %c0_i32_2 = arith.constant 0 : i32
    return %c0_i32, %c0_i32_0, %c0_i32_1 : i32, i32, i32
  }
  func.func @transform_8(%arg0: i32) -> (i32, i32, i32) {
    %c0_i32 = arith.constant 0 : i32
    %c0_i32_0 = arith.constant 0 : i32
    %c0_i32_1 = arith.constant 0 : i32
    %c0_i32_2 = arith.constant 0 : i32
    return %c0_i32, %c0_i32_0, %c0_i32_1 : i32, i32, i32
  }
  func.func @transform_9(%arg0: i32) -> (i32, i32, i32) {
    %c0_i32 = arith.constant 0 : i32
    %c0_i32_0 = arith.constant 0 : i32
    %c0_i32_1 = arith.constant 0 : i32
    %c0_i32_2 = arith.constant 0 : i32
    return %c0_i32, %c0_i32_0, %c0_i32_1 : i32, i32, i32
  }
  func.func @transform_10(%arg0: i32) -> (i32, i32) {
    %c0_i32 = arith.constant 0 : i32
    %c0_i32_0 = arith.constant 0 : i32
    %c0_i32_1 = arith.constant 0 : i32
    return %c0_i32, %c0_i32_0 : i32, i32
  }
  func.func @transform_11(%arg0: i32) -> (i32, i32) {
    %c0_i32 = arith.constant 0 : i32
    %c0_i32_0 = arith.constant 0 : i32
    %c0_i32_1 = arith.constant 0 : i32
    return %c0_i32, %c0_i32_0 : i32, i32
  }
  func.func @transform_12(%arg0: i32) -> (i32, i32) {
    %c0_i32 = arith.constant 0 : i32
    %c0_i32_0 = arith.constant 0 : i32
    %c0_i32_1 = arith.constant 0 : i32
    return %c0_i32, %c0_i32_0 : i32, i32
  }
  func.func @transform_13(%arg0: i32) -> (i32, i32) {
    %c0_i32 = arith.constant 0 : i32
    %c0_i32_0 = arith.constant 0 : i32
    %c0_i32_1 = arith.constant 0 : i32
    return %c0_i32, %c0_i32_0 : i32, i32
  }
  func.func @transform_14(%arg0: i32) -> (i32, i32) {
    %c0_i32 = arith.constant 0 : i32
    %c0_i32_0 = arith.constant 0 : i32
    %c0_i32_1 = arith.constant 0 : i32
    return %c0_i32, %c0_i32_0 : i32, i32
  }
  func.func @transform_15(%arg0: i32) -> (i32, i32) {
    %c0_i32 = arith.constant 0 : i32
    %c0_i32_0 = arith.constant 0 : i32
    %c0_i32_1 = arith.constant 0 : i32
    return %c0_i32, %c0_i32_0 : i32, i32
  }
  func.func @transform_16(%arg0: i32) -> (i32, i32) {
    %c0_i32 = arith.constant 0 : i32
    %c0_i32_0 = arith.constant 0 : i32
    %c0_i32_1 = arith.constant 0 : i32
    return %c0_i32, %c0_i32_0 : i32, i32
  }
  func.func @transform_17(%arg0: i32) -> (i32, i32) {
    %c0_i32 = arith.constant 0 : i32
    %c0_i32_0 = arith.constant 0 : i32
    %c0_i32_1 = arith.constant 0 : i32
    return %c0_i32, %c0_i32_0 : i32, i32
  }
  func.func @transform_18(%arg0: i32) -> (i32, i32) {
    %c0_i32 = arith.constant 0 : i32
    %c0_i32_0 = arith.constant 0 : i32
    %c0_i32_1 = arith.constant 0 : i32
    return %c0_i32, %c0_i32_0 : i32, i32
  }
  func.func @transform_19(%arg0: i32) -> (i32, i32) {
    %c0_i32 = arith.constant 0 : i32
    %c0_i32_0 = arith.constant 0 : i32
    %c0_i32_1 = arith.constant 0 : i32
    return %c0_i32, %c0_i32_0 : i32, i32
  }
  func.func @transform_20(%arg0: i32) -> (i32, i32, i32) {
    %c0_i32 = arith.constant 0 : i32
    %c0_i32_0 = arith.constant 0 : i32
    %c0_i32_1 = arith.constant 0 : i32
    return %arg0, %c0_i32, %c0_i32_0 : i32, i32, i32
  }
}

</mosaic_0001>

<llo_original>
// kernel: tpu_custom_call.1
$region0: #{tpu_custom_call.1}
  #allocation0 [shape = 'u32[]', space=smem, size = 0x4, offset = 0x4, fixed_abs, tag = 'smem constant byte address 0x4 - core index']
  #allocation1 [shape = 'u32[144,128]{1,0:T(1,128)}', space=vmem, size = 0x12000, scoped, tag = 'internal scratch']
  #allocation2 [shape = 'f32[60,32]{1,0:T(8,128)}', space=vmem, size = 0x8000, scoped, tag = 'scratch operand']
  %s0 = inlined_call_operand.vmem [shape: f32[2,16,8], index: 0, kind: input, shape index: {}]
  %s1 = inlined_call_operand.vmem [shape: bf16[8,32], index: 1, kind: input, shape index: {}]
  %s2 = inlined_call_operand.vmem [shape: f32[1,32], index: 2, kind: input, shape index: {}]
  %s3 = inlined_call_operand.vmem [shape: f32[1,32], index: 3, kind: input, shape index: {}]
  %s4 = inlined_call_operand.vmem [shape: f32[1,32], index: 4, kind: input, shape index: {}]
  %s5 = inlined_call_operand.vmem [shape: f32[1,32], index: 5, kind: input, shape index: {}]
  %s6 = inlined_call_operand.vmem [shape: f32[4,5,32], index: 6, kind: input, shape index: {}]
  %s7 = inlined_call_operand.vmem [shape: f32[4,1,32], index: 7, kind: input, shape index: {}]
  %s8 = inlined_call_operand.vmem [shape: f32[4,1,32], index: 8, kind: input, shape index: {}]
  %s9 = inlined_call_operand.vmem [shape: f32[4,1,32], index: 9, kind: input, shape index: {}]
  %s10 = inlined_call_operand.vmem [shape: f32[1,32], index: 10, kind: input, shape index: {}]
  %s11 = inlined_call_operand.vmem [shape: f32[1,32], index: 11, kind: input, shape index: {}]
  %s12 = inlined_call_operand.vmem [shape: f32[1,32], index: 12, kind: input, shape index: {}]
  %s13 = inlined_call_operand.vmem [shape: bf16[32,8], index: 13, kind: input, shape index: {}]
  %s14 = inlined_call_operand.vmem [shape: f32[1,8], index: 14, kind: input, shape index: {}]
  %s15 = inlined_call_operand.vmem [shape: f32[1,8], index: 15, kind: input, shape index: {}]
  %s16 = inlined_call_operand.vmem [shape: f32[1,8], index: 16, kind: input, shape index: {}]
  %s17 = inlined_call_operand.vmem [shape: f32[1,8], index: 17, kind: input, shape index: {}]
  %s18 = inlined_call_operand.vmem [shape: f32[1,8], index: 18, kind: input, shape index: {}]
  %s19 = inlined_call_operand.vmem [shape: f32[1,8], index: 19, kind: input, shape index: {}]
  %s20 = inlined_call_operand.vmem [shape: f32[2,16,8], index: 20, kind: output, shape index: {}]
  %s21 = sld [smem:[#allocation0]]
  $region113: #{tpu_custom_call.1} parent=0
    _
  %s23 = ssub.s32 1, %s21
  %s24 = scalar_select 0, %s23, %s21
  loop: start=0, step=1, limit=4
  $region2: #{tpu_custom_call.1} parent=0 // loop_pre_header
    _
  $region3: #{tpu_custom_call.1} parent=0 // loop_header
    %s26 = sphi 0, %s30
    %p27 = scmp.ge.s32.totalorder %s26, 4
    %s36 = sphi 0, %s38
    %s39 = sphi 0, %s36
    %s40 = sphi 0, %s39
    %s56 = sphi 0, %s40
    %s60 = sphi 0, %s60
    %s62 = sphi 0, %s60
    %s63 = sphi 0, %s62
    %s77 = sphi 0, %s63
    %s81 = sphi 0, %s81
    %s83 = sphi 0, %s81
    %s84 = sphi 0, %s83
    %s98 = sphi 0, %s84
    %s102 = sphi 0, %s102
    %s104 = sphi 0, %s102
    %s105 = sphi 0, %s104
    %s119 = sphi 0, %s105
    %s123 = sphi 0, %s123
    %s125 = sphi 0, %s123
    %s126 = sphi 0, %s125
    %s140 = sphi 0, %s126
    %s144 = sphi 0, %s144
    %s146 = sphi 0, %s144
    %s147 = sphi 0, %s146
    %s161 = sphi 0, %s147
    %s165 = sphi 0, %s165
    %s167 = sphi 0, %s165
    %s168 = sphi 0, %s167
    %s182 = sphi 0, %s168
    %s186 = sphi 0, %s186
    %s188 = sphi 0, %s186
    %s189 = sphi 0, %s188
    %s203 = sphi 0, %s189
    %s207 = sphi 0, %s207
    %s209 = sphi 0, %s207
    %s210 = sphi 0, %s209
    %s224 = sphi 0, %s210
    %s228 = sphi 0, %s228
    %s230 = sphi 0, %s228
    %s231 = sphi 0, %s230
    %s245 = sphi 0, %s231
    %s249 = sphi 0, %s249
    %s251 = sphi 0, %s249
    %s252 = sphi 0, %s251
    %s266 = sphi 0, %s252
    %s270 = sphi 0, %s270
    %s272 = sphi 0, %s270
    %s273 = sphi 0, %s272
    %s287 = sphi 0, %s273
    %s291 = sphi 0, %s291
    %s293 = sphi 0, %s291
    %s294 = sphi 0, %s293
    %s308 = sphi 0, %s294
    %s312 = sphi 0, %s312
    %s314 = sphi 0, %s312
    %s315 = sphi 0, %s314
    %s329 = sphi 0, %s315
    %s333 = sphi 0, %s333
    %s335 = sphi 0, %s333
    %s336 = sphi 0, %s335
    %s350 = sphi 0, %s336
    %s354 = sphi 0, %s354
    %s356 = sphi 0, %s354
    %s357 = sphi 0, %s356
    %s371 = sphi 0, %s357
    %s375 = sphi 0, %s375
    %s377 = sphi 0, %s375
    %s378 = sphi 0, %s377
    %s392 = sphi 0, %s378
    %s396 = sphi 0, %s396
    %s398 = sphi 0, %s396
    %s399 = sphi 0, %s398
    %s413 = sphi 0, %s399
    %s417 = sphi 0, %s417
    %s419 = sphi 0, %s417
    %s420 = sphi 0, %s419
    %s434 = sphi 0, %s420
    %s438 = sphi 0, %s438
    %s440 = sphi 0, %s438
    %s441 = sphi 0, %s440
    %s455 = sphi 0, %s441
    %s461 = sphi 0, %s463
    %s464 = sphi 0, %s461
    %s465 = sphi 0, %s464
    %s481 = sphi 0, %s465
  $region4: #{tpu_custom_call.1} parent=0 // loop_header_branch
    %29 = sbr.rel (%p27) target = $region8
  $region5: #{tpu_custom_call.1} parent=0 // loop_body
    %s31 = ssub.s32 %s26, 1
    %s32 = ssub.s32 %s26, 2
    %s33 = sadd.s32 %s26, 1
    %s34 = ssub.s32 %s26, %s33
    %p35 = scmp.eq.s32.totalorder %s34, 0
    %s37 = sadd.s32 %s36, 1
    %s38 = scalar_select %p35, %s36, %s37
    %p41 = pneg %p35
    %p42 = scmp.eq.s32.totalorder %s26, 1
    %p43 = por %p41, %p42
    %p44 = scmp.ne.s32.totalorder %s36, %s39
    %p45 = scmp.eq.s32.totalorder %s26, 0
    %p46 = por %p44, %p45
    %p47 = scmp.ne.s32.totalorder %s36, %s39
    %p48 = scmp.eq.s32.totalorder %s31, 1
    %p49 = por %p47, %p48
    %p50 = scmp.ne.s32.totalorder %s39, %s40
    %p51 = scmp.eq.s32.totalorder %s31, 0
    %p52 = por %p50, %p51
    %p53 = scmp.ne.s32.totalorder %s39, %s40
    %p54 = scmp.eq.s32.totalorder %s32, 1
    %p55 = por %p53, %p54
    %p57 = scmp.ne.s32.totalorder %s40, %s56
    %p58 = scmp.eq.s32.totalorder %s32, 0
    %p59 = por %p57, %p58
    %s61 = sadd.s32 %s60, 1
    %p64 = scmp.eq.s32.totalorder %s26, 1
    %p65 = scmp.ne.s32.totalorder %s60, %s62
    %p66 = scmp.eq.s32.totalorder %s26, 0
    %p67 = por %p65, %p66
    %p68 = scmp.ne.s32.totalorder %s60, %s62
    %p69 = scmp.eq.s32.totalorder %s31, 1
    %p70 = por %p68, %p69
    %p71 = scmp.ne.s32.totalorder %s62, %s63
    %p72 = scmp.eq.s32.totalorder %s31, 0
    %p73 = por %p71, %p72
    %p74 = scmp.ne.s32.totalorder %s62, %s63
    %p75 = scmp.eq.s32.totalorder %s32, 1
    %p76 = por %p74, %p75
    %p78 = scmp.ne.s32.totalorder %s63, %s77
    %p79 = scmp.eq.s32.totalorder %s32, 0
    %p80 = por %p78, %p79
    %s82 = sadd.s32 %s81, 1
    %p85 = scmp.eq.s32.totalorder %s26, 1
    %p86 = scmp.ne.s32.totalorder %s81, %s83
    %p87 = scmp.eq.s32.totalorder %s26, 0
    %p88 = por %p86, %p87
    %p89 = scmp.ne.s32.totalorder %s81, %s83
    %p90 = scmp.eq.s32.totalorder %s31, 1
    %p91 = por %p89, %p90
    %p92 = scmp.ne.s32.totalorder %s83, %s84
    %p93 = scmp.eq.s32.totalorder %s31, 0
    %p94 = por %p92, %p93
    %p95 = scmp.ne.s32.totalorder %s83, %s84
    %p96 = scmp.eq.s32.totalorder %s32, 1
    %p97 = por %p95, %p96
    %p99 = scmp.ne.s32.totalorder %s84, %s98
    %p100 = scmp.eq.s32.totalorder %s32, 0
    %p101 = por %p99, %p100
    %s103 = sadd.s32 %s102, 1
    %p106 = scmp.eq.s32.totalorder %s26, 1
    %p107 = scmp.ne.s32.totalorder %s102, %s104
    %p108 = scmp.eq.s32.totalorder %s26, 0
    %p109 = por %p107, %p108
    %p110 = scmp.ne.s32.totalorder %s102, %s104
    %p111 = scmp.eq.s32.totalorder %s31, 1
    %p112 = por %p110, %p111
    %p113 = scmp.ne.s32.totalorder %s104, %s105
    %p114 = scmp.eq.s32.totalorder %s31, 0
    %p115 = por %p113, %p114
    %p116 = scmp.ne.s32.totalorder %s104, %s105
    %p117 = scmp.eq.s32.totalorder %s32, 1
    %p118 = por %p116, %p117
    %p120 = scmp.ne.s32.totalorder %s105, %s119
    %p121 = scmp.eq.s32.totalorder %s32, 0
    %p122 = por %p120, %p121
    %s124 = sadd.s32 %s123, 1
    %p127 = scmp.eq.s32.totalorder %s26, 1
    %p128 = scmp.ne.s32.totalorder %s123, %s125
    %p129 = scmp.eq.s32.totalorder %s26, 0
    %p130 = por %p128, %p129
    %p131 = scmp.ne.s32.totalorder %s123, %s125
    %p132 = scmp.eq.s32.totalorder %s31, 1
    %p133 = por %p131, %p132
    %p134 = scmp.ne.s32.totalorder %s125, %s126
    %p135 = scmp.eq.s32.totalorder %s31, 0
    %p136 = por %p134, %p135
    %p137 = scmp.ne.s32.totalorder %s125, %s126
    %p138 = scmp.eq.s32.totalorder %s32, 1
    %p139 = por %p137, %p138
    %p141 = scmp.ne.s32.totalorder %s126, %s140
    %p142 = scmp.eq.s32.totalorder %s32, 0
    %p143 = por %p141, %p142
    %s145 = sadd.s32 %s144, 1
    %p148 = scmp.eq.s32.totalorder %s26, 1
    %p149 = scmp.ne.s32.totalorder %s144, %s146
    %p150 = scmp.eq.s32.totalorder %s26, 0
    %p151 = por %p149, %p150
    %p152 = scmp.ne.s32.totalorder %s144, %s146
    %p153 = scmp.eq.s32.totalorder %s31, 1
    %p154 = por %p152, %p153
    %p155 = scmp.ne.s32.totalorder %s146, %s147
    %p156 = scmp.eq.s32.totalorder %s31, 0
    %p157 = por %p155, %p156
    %p158 = scmp.ne.s32.totalorder %s146, %s147
    %p159 = scmp.eq.s32.totalorder %s32, 1
    %p160 = por %p158, %p159
    %p162 = scmp.ne.s32.totalorder %s147, %s161
    %p163 = scmp.eq.s32.totalorder %s32, 0
    %p164 = por %p162, %p163
    %s166 = sadd.s32 %s165, 1
    %p169 = scmp.eq.s32.totalorder %s26, 1
    %p170 = scmp.ne.s32.totalorder %s165, %s167
    %p171 = scmp.eq.s32.totalorder %s26, 0
    %p172 = por %p170, %p171
    %p173 = scmp.ne.s32.totalorder %s165, %s167
    %p174 = scmp.eq.s32.totalorder %s31, 1
    %p175 = por %p173, %p174
    %p176 = scmp.ne.s32.totalorder %s167, %s168
    %p177 = scmp.eq.s32.totalorder %s31, 0
    %p178 = por %p176, %p177
    %p179 = scmp.ne.s32.totalorder %s167, %s168
    %p180 = scmp.eq.s32.totalorder %s32, 1
    %p181 = por %p179, %p180
    %p183 = scmp.ne.s32.totalorder %s168, %s182
    %p184 = scmp.eq.s32.totalorder %s32, 0
    %p185 = por %p183, %p184
    %s187 = sadd.s32 %s186, 1
    %p190 = scmp.eq.s32.totalorder %s26, 1
    %p191 = scmp.ne.s32.totalorder %s186, %s188
    %p192 = scmp.eq.s32.totalorder %s26, 0
    %p193 = por %p191, %p192
    %p194 = scmp.ne.s32.totalorder %s186, %s188
    %p195 = scmp.eq.s32.totalorder %s31, 1
    %p196 = por %p194, %p195
    %p197 = scmp.ne.s32.totalorder %s188, %s189
    %p198 = scmp.eq.s32.totalorder %s31, 0
    %p199 = por %p197, %p198
    %p200 = scmp.ne.s32.totalorder %s188, %s189
    %p201 = scmp.eq.s32.totalorder %s32, 1
    %p202 = por %p200, %p201
    %p204 = scmp.ne.s32.totalorder %s189, %s203
    %p205 = scmp.eq.s32.totalorder %s32, 0
    %p206 = por %p204, %p205
    %s208 = sadd.s32 %s207, 1
    %p211 = scmp.eq.s32.totalorder %s26, 1
    %p212 = scmp.ne.s32.totalorder %s207, %s209
    %p213 = scmp.eq.s32.totalorder %s26, 0
    %p214 = por %p212, %p213
    %p215 = scmp.ne.s32.totalorder %s207, %s209
    %p216 = scmp.eq.s32.totalorder %s31, 1
    %p217 = por %p215, %p216
    %p218 = scmp.ne.s32.totalorder %s209, %s210
    %p219 = scmp.eq.s32.totalorder %s31, 0
    %p220 = por %p218, %p219
    %p221 = scmp.ne.s32.totalorder %s209, %s210
    %p222 = scmp.eq.s32.totalorder %s32, 1
    %p223 = por %p221, %p222
    %p225 = scmp.ne.s32.totalorder %s210, %s224
    %p226 = scmp.eq.s32.totalorder %s32, 0
    %p227 = por %p225, %p226
    %s229 = sadd.s32 %s228, 1
    %p232 = scmp.eq.s32.totalorder %s26, 1
    %p233 = scmp.ne.s32.totalorder %s228, %s230
    %p234 = scmp.eq.s32.totalorder %s26, 0
    %p235 = por %p233, %p234
    %p236 = scmp.ne.s32.totalorder %s228, %s230
    %p237 = scmp.eq.s32.totalorder %s31, 1
    %p238 = por %p236, %p237
    %p239 = scmp.ne.s32.totalorder %s230, %s231
    %p240 = scmp.eq.s32.totalorder %s31, 0
    %p241 = por %p239, %p240
    %p242 = scmp.ne.s32.totalorder %s230, %s231
    %p243 = scmp.eq.s32.totalorder %s32, 1
    %p244 = por %p242, %p243
    %p246 = scmp.ne.s32.totalorder %s231, %s245
    %p247 = scmp.eq.s32.totalorder %s32, 0
    %p248 = por %p246, %p247
    %s250 = sadd.s32 %s249, 1
    %p253 = scmp.eq.s32.totalorder %s26, 1
    %p254 = scmp.ne.s32.totalorder %s249, %s251
    %p255 = scmp.eq.s32.totalorder %s26, 0
    %p256 = por %p254, %p255
    %p257 = scmp.ne.s32.totalorder %s249, %s251
    %p258 = scmp.eq.s32.totalorder %s31, 1
    %p259 = por %p257, %p258
    %p260 = scmp.ne.s32.totalorder %s251, %s252
    %p261 = scmp.eq.s32.totalorder %s31, 0
    %p262 = por %p260, %p261
    %p263 = scmp.ne.s32.totalorder %s251, %s252
    %p264 = scmp.eq.s32.totalorder %s32, 1
    %p265 = por %p263, %p264
    %p267 = scmp.ne.s32.totalorder %s252, %s266
    %p268 = scmp.eq.s32.totalorder %s32, 0
    %p269 = por %p267, %p268
    %s271 = sadd.s32 %s270, 1
    %p274 = scmp.eq.s32.totalorder %s26, 1
    %p275 = scmp.ne.s32.totalorder %s270, %s272
    %p276 = scmp.eq.s32.totalorder %s26, 0
    %p277 = por %p275, %p276
    %p278 = scmp.ne.s32.totalorder %s270, %s272
    %p279 = scmp.eq.s32.totalorder %s31, 1
    %p280 = por %p278, %p279
    %p281 = scmp.ne.s32.totalorder %s272, %s273
    %p282 = scmp.eq.s32.totalorder %s31, 0
    %p283 = por %p281, %p282
    %p284 = scmp.ne.s32.totalorder %s272, %s273
    %p285 = scmp.eq.s32.totalorder %s32, 1
    %p286 = por %p284, %p285
    %p288 = scmp.ne.s32.totalorder %s273, %s287
    %p289 = scmp.eq.s32.totalorder %s32, 0
    %p290 = por %p288, %p289
    %s292 = sadd.s32 %s291, 1
    %p295 = scmp.eq.s32.totalorder %s26, 1
    %p296 = scmp.ne.s32.totalorder %s291, %s293
    %p297 = scmp.eq.s32.totalorder %s26, 0
    %p298 = por %p296, %p297
    %p299 = scmp.ne.s32.totalorder %s291, %s293
    %p300 = scmp.eq.s32.totalorder %s31, 1
    %p301 = por %p299, %p300
    %p302 = scmp.ne.s32.totalorder %s293, %s294
    %p303 = scmp.eq.s32.totalorder %s31, 0
    %p304 = por %p302, %p303
    %p305 = scmp.ne.s32.totalorder %s293, %s294
    %p306 = scmp.eq.s32.totalorder %s32, 1
    %p307 = por %p305, %p306
    %p309 = scmp.ne.s32.totalorder %s294, %s308
    %p310 = scmp.eq.s32.totalorder %s32, 0
    %p311 = por %p309, %p310
    %s313 = sadd.s32 %s312, 1
    %p316 = scmp.eq.s32.totalorder %s26, 1
    %p317 = scmp.ne.s32.totalorder %s312, %s314
    %p318 = scmp.eq.s32.totalorder %s26, 0
    %p319 = por %p317, %p318
    %p320 = scmp.ne.s32.totalorder %s312, %s314
    %p321 = scmp.eq.s32.totalorder %s31, 1
    %p322 = por %p320, %p321
    %p323 = scmp.ne.s32.totalorder %s314, %s315
    %p324 = scmp.eq.s32.totalorder %s31, 0
    %p325 = por %p323, %p324
    %p326 = scmp.ne.s32.totalorder %s314, %s315
    %p327 = scmp.eq.s32.totalorder %s32, 1
    %p328 = por %p326, %p327
    %p330 = scmp.ne.s32.totalorder %s315, %s329
    %p331 = scmp.eq.s32.totalorder %s32, 0
    %p332 = por %p330, %p331
    %s334 = sadd.s32 %s333, 1
    %p337 = scmp.eq.s32.totalorder %s26, 1
    %p338 = scmp.ne.s32.totalorder %s333, %s335
    %p339 = scmp.eq.s32.totalorder %s26, 0
    %p340 = por %p338, %p339
    %p341 = scmp.ne.s32.totalorder %s333, %s335
    %p342 = scmp.eq.s32.totalorder %s31, 1
    %p343 = por %p341, %p342
    %p344 = scmp.ne.s32.totalorder %s335, %s336
    %p345 = scmp.eq.s32.totalorder %s31, 0
    %p346 = por %p344, %p345
    %p347 = scmp.ne.s32.totalorder %s335, %s336
    %p348 = scmp.eq.s32.totalorder %s32, 1
    %p349 = por %p347, %p348
    %p351 = scmp.ne.s32.totalorder %s336, %s350
    %p352 = scmp.eq.s32.totalorder %s32, 0
    %p353 = por %p351, %p352
    %s355 = sadd.s32 %s354, 1
    %p358 = scmp.eq.s32.totalorder %s26, 1
    %p359 = scmp.ne.s32.totalorder %s354, %s356
    %p360 = scmp.eq.s32.totalorder %s26, 0
    %p361 = por %p359, %p360
    %p362 = scmp.ne.s32.totalorder %s354, %s356
    %p363 = scmp.eq.s32.totalorder %s31, 1
    %p364 = por %p362, %p363
    %p365 = scmp.ne.s32.totalorder %s356, %s357
    %p366 = scmp.eq.s32.totalorder %s31, 0
    %p367 = por %p365, %p366
    %p368 = scmp.ne.s32.totalorder %s356, %s357
    %p369 = scmp.eq.s32.totalorder %s32, 1
    %p370 = por %p368, %p369
    %p372 = scmp.ne.s32.totalorder %s357, %s371
    %p373 = scmp.eq.s32.totalorder %s32, 0
    %p374 = por %p372, %p373
    %s376 = sadd.s32 %s375, 1
    %p379 = scmp.eq.s32.totalorder %s26, 1
    %p380 = scmp.ne.s32.totalorder %s375, %s377
    %p381 = scmp.eq.s32.totalorder %s26, 0
    %p382 = por %p380, %p381
    %p383 = scmp.ne.s32.totalorder %s375, %s377
    %p384 = scmp.eq.s32.totalorder %s31, 1
    %p385 = por %p383, %p384
    %p386 = scmp.ne.s32.totalorder %s377, %s378
    %p387 = scmp.eq.s32.totalorder %s31, 0
    %p388 = por %p386, %p387
    %p389 = scmp.ne.s32.totalorder %s377, %s378
    %p390 = scmp.eq.s32.totalorder %s32, 1
    %p391 = por %p389, %p390
    %p393 = scmp.ne.s32.totalorder %s378, %s392
    %p394 = scmp.eq.s32.totalorder %s32, 0
    %p395 = por %p393, %p394
    %s397 = sadd.s32 %s396, 1
    %p400 = scmp.eq.s32.totalorder %s26, 1
    %p401 = scmp.ne.s32.totalorder %s396, %s398
    %p402 = scmp.eq.s32.totalorder %s26, 0
    %p403 = por %p401, %p402
    %p404 = scmp.ne.s32.totalorder %s396, %s398
    %p405 = scmp.eq.s32.totalorder %s31, 1
    %p406 = por %p404, %p405
    %p407 = scmp.ne.s32.totalorder %s398, %s399
    %p408 = scmp.eq.s32.totalorder %s31, 0
    %p409 = por %p407, %p408
    %p410 = scmp.ne.s32.totalorder %s398, %s399
    %p411 = scmp.eq.s32.totalorder %s32, 1
    %p412 = por %p410, %p411
    %p414 = scmp.ne.s32.totalorder %s399, %s413
    %p415 = scmp.eq.s32.totalorder %s32, 0
    %p416 = por %p414, %p415
    %s418 = sadd.s32 %s417, 1
    %p421 = scmp.eq.s32.totalorder %s26, 1
    %p422 = scmp.ne.s32.totalorder %s417, %s419
    %p423 = scmp.eq.s32.totalorder %s26, 0
    %p424 = por %p422, %p423
    %p425 = scmp.ne.s32.totalorder %s417, %s419
    %p426 = scmp.eq.s32.totalorder %s31, 1
    %p427 = por %p425, %p426
    %p428 = scmp.ne.s32.totalorder %s419, %s420
    %p429 = scmp.eq.s32.totalorder %s31, 0
    %p430 = por %p428, %p429
    %p431 = scmp.ne.s32.totalorder %s419, %s420
    %p432 = scmp.eq.s32.totalorder %s32, 1
    %p433 = por %p431, %p432
    %p435 = scmp.ne.s32.totalorder %s420, %s434
    %p436 = scmp.eq.s32.totalorder %s32, 0
    %p437 = por %p435, %p436
    %s439 = sadd.s32 %s438, 1
    %p442 = scmp.eq.s32.totalorder %s26, 1
    %p443 = scmp.ne.s32.totalorder %s438, %s440
    %p444 = scmp.eq.s32.totalorder %s26, 0
    %p445 = por %p443, %p444
    %p446 = scmp.ne.s32.totalorder %s438, %s440
    %p447 = scmp.eq.s32.totalorder %s31, 1
    %p448 = por %p446, %p447
    %p449 = scmp.ne.s32.totalorder %s440, %s441
    %p450 = scmp.eq.s32.totalorder %s31, 0
    %p451 = por %p449, %p450
    %p452 = scmp.ne.s32.totalorder %s440, %s441
    %p453 = scmp.eq.s32.totalorder %s32, 1
    %p454 = por %p452, %p453
    %p456 = scmp.ne.s32.totalorder %s441, %s455
    %p457 = scmp.eq.s32.totalorder %s32, 0
    %p458 = por %p456, %p457
    %s459 = ssub.s32 %s26, %s33
    %p460 = scmp.eq.s32.totalorder %s459, 0
    %s462 = sadd.s32 %s461, 1
    %s463 = scalar_select %p460, %s461, %s462
    %p466 = pneg %p460
    %p467 = scmp.eq.s32.totalorder %s26, 1
    %p468 = por %p466, %p467
    %p469 = scmp.ne.s32.totalorder %s461, %s464
    %p470 = scmp.eq.s32.totalorder %s26, 0
    %p471 = por %p469, %p470
    %p472 = scmp.ne.s32.totalorder %s461, %s464
    %p473 = scmp.eq.s32.totalorder %s31, 1
    %p474 = por %p472, %p473
    %p475 = scmp.ne.s32.totalorder %s464, %s465
    %p476 = scmp.eq.s32.totalorder %s31, 0
    %p477 = por %p475, %p476
    %p478 = scmp.ne.s32.totalorder %s464, %s465
    %p479 = scmp.eq.s32.totalorder %s32, 1
    %p480 = por %p478, %p479
    %p482 = scmp.ne.s32.totalorder %s465, %s481
    %p483 = scmp.eq.s32.totalorder %s32, 0
    %p484 = por %p482, %p483
    %p485 = scmp.le.s32.totalorder 1, %s26
    %p486 = scmp.lt.s32.totalorder %s26, 3
    %p487 = pnand %p485, %p486
    %p488 = pneg %p487
    // Predicated region
    $region9: #{tpu_custom_call.1} parent=5 // pred_check
      _
    $region10: #{tpu_custom_call.1} parent=5 // pred_check_branch
      %490 = sbr.rel (%p487) target = $region12
    $region11: #{tpu_custom_call.1} parent=5 // pred_region
      %s491 = ssub.s32 %s26, 1
      // Predicated region
      $region13: #{tpu_custom_call.1} parent=11 // pred_check
        %p492 = pneg %p73
      $region14: #{tpu_custom_call.1} parent=11 // pred_check_branch
        %494 = sbr.rel (%p492) target = $region16
      $region15: #{tpu_custom_call.1} parent=11 // pred_region
        _
      $region16: #{tpu_custom_call.1} parent=11 // pred_fallthru
        _
      // Predicated region
      $region17: #{tpu_custom_call.1} parent=11 // pred_check
        %p495 = pneg %p94
      $region18: #{tpu_custom_call.1} parent=11 // pred_check_branch
        %497 = sbr.rel (%p495) target = $region20
      $region19: #{tpu_custom_call.1} parent=11 // pred_region
        _
      $region20: #{tpu_custom_call.1} parent=11 // pred_fallthru
        _
      // Predicated region
      $region21: #{tpu_custom_call.1} parent=11 // pred_check
        %p498 = pneg %p115
      $region22: #{tpu_custom_call.1} parent=11 // pred_check_branch
        %500 = sbr.rel (%p498) target = $region24
      $region23: #{tpu_custom_call.1} parent=11 // pred_region
        _
      $region24: #{tpu_custom_call.1} parent=11 // pred_fallthru
        _
      // Predicated region
      $region25: #{tpu_custom_call.1} parent=11 // pred_check
        %p501 = pneg %p136
      $region26: #{tpu_custom_call.1} parent=11 // pred_check_branch
        %503 = sbr.rel (%p501) target = $region28
      $region27: #{tpu_custom_call.1} parent=11 // pred_region
        _
      $region28: #{tpu_custom_call.1} parent=11 // pred_fallthru
        _
      // Predicated region
      $region29: #{tpu_custom_call.1} parent=11 // pred_check
        %p504 = pneg %p157
      $region30: #{tpu_custom_call.1} parent=11 // pred_check_branch
        %506 = sbr.rel (%p504) target = $region32
      $region31: #{tpu_custom_call.1} parent=11 // pred_region
        _
      $region32: #{tpu_custom_call.1} parent=11 // pred_fallthru
        _
      // Predicated region
      $region33: #{tpu_custom_call.1} parent=11 // pred_check
        %p507 = pneg %p178
      $region34: #{tpu_custom_call.1} parent=11 // pred_check_branch
        %509 = sbr.rel (%p507) target = $region36
      $region35: #{tpu_custom_call.1} parent=11 // pred_region
        _
      $region36: #{tpu_custom_call.1} parent=11 // pred_fallthru
        _
      // Predicated region
      $region37: #{tpu_custom_call.1} parent=11 // pred_check
        %p510 = pneg %p199
      $region38: #{tpu_custom_call.1} parent=11 // pred_check_branch
        %512 = sbr.rel (%p510) target = $region40
      $region39: #{tpu_custom_call.1} parent=11 // pred_region
        _
      $region40: #{tpu_custom_call.1} parent=11 // pred_fallthru
        _
      // Predicated region
      $region41: #{tpu_custom_call.1} parent=11 // pred_check
        %p513 = pneg %p220
      $region42: #{tpu_custom_call.1} parent=11 // pred_check_branch
        %515 = sbr.rel (%p513) target = $region44
      $region43: #{tpu_custom_call.1} parent=11 // pred_region
        _
      $region44: #{tpu_custom_call.1} parent=11 // pred_fallthru
        _
      // Predicated region
      $region45: #{tpu_custom_call.1} parent=11 // pred_check
        %p516 = pneg %p241
      $region46: #{tpu_custom_call.1} parent=11 // pred_check_branch
        %518 = sbr.rel (%p516) target = $region48
      $region47: #{tpu_custom_call.1} parent=11 // pred_region
        _
      $region48: #{tpu_custom_call.1} parent=11 // pred_fallthru
        _
      // Predicated region
      $region49: #{tpu_custom_call.1} parent=11 // pred_check
        %p519 = pneg %p262
      $region50: #{tpu_custom_call.1} parent=11 // pred_check_branch
        %521 = sbr.rel (%p519) target = $region52
      $region51: #{tpu_custom_call.1} parent=11 // pred_region
        _
      $region52: #{tpu_custom_call.1} parent=11 // pred_fallthru
        _
      // Predicated region
      $region53: #{tpu_custom_call.1} parent=11 // pred_check
        %p522 = pneg %p283
      $region54: #{tpu_custom_call.1} parent=11 // pred_check_branch
        %524 = sbr.rel (%p522) target = $region56
      $region55: #{tpu_custom_call.1} parent=11 // pred_region
        _
      $region56: #{tpu_custom_call.1} parent=11 // pred_fallthru
        _
      // Predicated region
      $region57: #{tpu_custom_call.1} parent=11 // pred_check
        %p525 = pneg %p304
      $region58: #{tpu_custom_call.1} parent=11 // pred_check_branch
        %527 = sbr.rel (%p525) target = $region60
      $region59: #{tpu_custom_call.1} parent=11 // pred_region
        _
      $region60: #{tpu_custom_call.1} parent=11 // pred_fallthru
        _
      // Predicated region
      $region61: #{tpu_custom_call.1} parent=11 // pred_check
        %p528 = pneg %p325
      $region62: #{tpu_custom_call.1} parent=11 // pred_check_branch
        %530 = sbr.rel (%p528) target = $region64
      $region63: #{tpu_custom_call.1} parent=11 // pred_region
        _
      $region64: #{tpu_custom_call.1} parent=11 // pred_fallthru
        _
      // Predicated region
      $region65: #{tpu_custom_call.1} parent=11 // pred_check
        %p531 = pneg %p346
      $region66: #{tpu_custom_call.1} parent=11 // pred_check_branch
        %533 = sbr.rel (%p531) target = $region68
      $region67: #{tpu_custom_call.1} parent=11 // pred_region
        _
      $region68: #{tpu_custom_call.1} parent=11 // pred_fallthru
        _
      // Predicated region
      $region69: #{tpu_custom_call.1} parent=11 // pred_check
        %p534 = pneg %p367
      $region70: #{tpu_custom_call.1} parent=11 // pred_check_branch
        %536 = sbr.rel (%p534) target = $region72
      $region71: #{tpu_custom_call.1} parent=11 // pred_region
        _
      $region72: #{tpu_custom_call.1} parent=11 // pred_fallthru
        _
      // Predicated region
      $region73: #{tpu_custom_call.1} parent=11 // pred_check
        %p537 = pneg %p388
      $region74: #{tpu_custom_call.1} parent=11 // pred_check_branch
        %539 = sbr.rel (%p537) target = $region76
      $region75: #{tpu_custom_call.1} parent=11 // pred_region
        _
      $region76: #{tpu_custom_call.1} parent=11 // pred_fallthru
        _
      // Predicated region
      $region77: #{tpu_custom_call.1} parent=11 // pred_check
        %p540 = pneg %p409
      $region78: #{tpu_custom_call.1} parent=11 // pred_check_branch
        %542 = sbr.rel (%p540) target = $region80
      $region79: #{tpu_custom_call.1} parent=11 // pred_region
        _
      $region80: #{tpu_custom_call.1} parent=11 // pred_fallthru
        _
      // Predicated region
      $region81: #{tpu_custom_call.1} parent=11 // pred_check
        %p543 = pneg %p430
      $region82: #{tpu_custom_call.1} parent=11 // pred_check_branch
        %545 = sbr.rel (%p543) target = $region84
      $region83: #{tpu_custom_call.1} parent=11 // pred_region
        _
      $region84: #{tpu_custom_call.1} parent=11 // pred_fallthru
        _
      // Predicated region
      $region85: #{tpu_custom_call.1} parent=11 // pred_check
        %p546 = pneg %p451
      $region86: #{tpu_custom_call.1} parent=11 // pred_check_branch
        %548 = sbr.rel (%p546) target = $region88
      $region87: #{tpu_custom_call.1} parent=11 // pred_region
        _
      $region88: #{tpu_custom_call.1} parent=11 // pred_fallthru
        _
    $region12: #{tpu_custom_call.1} parent=5 // pred_fallthru
      _
    %p549 = scmp.lt.s32.totalorder %s26, 2
    // Predicated region
    $region89: #{tpu_custom_call.1} parent=5 // pred_check
      %p550 = pneg %p549
    $region90: #{tpu_custom_call.1} parent=5 // pred_check_branch
      %552 = sbr.rel (%p550) target = $region92
    $region91: #{tpu_custom_call.1} parent=5 // pred_region
      // Predicated region
      $region93: #{tpu_custom_call.1} parent=91 // pred_check
        %p553 = pneg %p46
      $region94: #{tpu_custom_call.1} parent=91 // pred_check_branch
        %555 = sbr.rel (%p553) target = $region96
      $region95: #{tpu_custom_call.1} parent=91 // pred_region
        %p556 = scmp.lt.s32.totalorder %s26, 1
        %s557 = scalar_select %p556, %s26, 1
        %s558 = smul.addr %s557, 2
        %s559 = smul.addr %s558, 8
        %s560 = scalar_lea.vmem %s0, %s559
      $region96: #{tpu_custom_call.1} parent=91 // pred_fallthru
        _
    $region92: #{tpu_custom_call.1} parent=5 // pred_fallthru
      _
    %p561 = scmp.le.s32.totalorder 1, %s26
    %p562 = scmp.lt.s32.totalorder %s26, 3
    %p563 = pnand %p561, %p562
    %p564 = pneg %p563
    // Predicated region
    $region97: #{tpu_custom_call.1} parent=5 // pred_check
      _
    $region98: #{tpu_custom_call.1} parent=5 // pred_check_branch
      %566 = sbr.rel (%p563) target = $region100
    $region99: #{tpu_custom_call.1} parent=5 // pred_region
      %s567 = ssub.s32 %s26, 1
      %p568 = scmp.lt.s32.totalorder %s31, 1
      %s569 = scalar_select %p568, %s31, 1
      %s570 = smul.addr %s569, 2
      %s571 = smul.addr %s570, 8
      %s572 = scalar_lea.vmem %s0, %s571
      %p573 = pneg %p52
      %p574 = pneg %p49
      %p575 = pneg %p73
      %p576 = pneg %p70
      %p577 = pneg %p94
      %p578 = pneg %p91
      %p579 = pneg %p115
      %p580 = pneg %p112
      %p581 = pneg %p136
      %p582 = pneg %p133
      %p583 = pneg %p157
      %p584 = pneg %p154
      %p585 = pneg %p178
      %p586 = pneg %p175
      %p587 = pneg %p199
      %p588 = pneg %p196
      %p589 = pneg %p220
      %p590 = pneg %p217
      %p591 = pneg %p241
      %p592 = pneg %p238
      %p593 = pneg %p262
      %p594 = pneg %p259
      %p595 = pneg %p283
      %p596 = pneg %p280
      %p597 = pneg %p304
      %p598 = pneg %p301
      %p599 = pneg %p325
      %p600 = pneg %p322
      %p601 = pneg %p346
      %p602 = pneg %p343
      %p603 = pneg %p367
      %p604 = pneg %p364
      %p605 = pneg %p388
      %p606 = pneg %p385
      %p607 = pneg %p409
      %p608 = pneg %p406
      %p609 = pneg %p430
      %p610 = pneg %p427
      %p611 = pneg %p451
      %p612 = pneg %p448
      %p613 = pneg %p477
      %p614 = pneg %p474
      %p615 = scmp.lt.s32.totalorder %s31, 1
      %s616 = scalar_select %p615, %s31, 1
      %s617 = smul.addr %s616, 2
      %s618 = smul.addr %s617, 8
      %s619 = scalar_lea.vmem %s20, %s618
      %p620 = scmp.lt.s32.totalorder %s31, 1
      %s621 = scalar_select %p620, %s31, 1
      %s622 = smul.addr %s621, 2
      %s623 = smul.addr %s622, 8
      %s624 = scalar_lea.vmem %s0, %s623
      %p625 = scmp.lt.s32.totalorder %s31, 1
      %s626 = scalar_select %p625, %s31, 1
      %s627 = smul.addr %s626, 2
      %s628 = smul.addr %s627, 8
      %s629 = scalar_lea.vmem %s20, %s628
      %v631 = vld [vmem:[%s624] sm:$0xff]
      %v632 = vld [vmem:[%s624 + $0x8] sm:$0xff]
      %vm633 = vcmask 254976
      %634 = vst.msk [vmem:[#allocation2] sm:$0x3] %vm633, 0.0
      %635 = vst.msk [vmem:[#allocation2 + $0x12] sm:$0x3] %vm633, 0.0
      %636 = vst.msk [vmem:[#allocation2 + $0x14] sm:$0x3] %vm633, 0.0
      %637 = vst.msk [vmem:[#allocation2 + $0x26] sm:$0x3] %vm633, 0.0
      %638 = vst.msk [vmem:[#allocation2 + $0x28] sm:$0x3] %vm633, 0.0
      %639 = vst.msk [vmem:[#allocation2 + $0x32] sm:$0x3] %vm633, 0.0
      %640 = vst.msk [vmem:[#allocation2 + $0x34] sm:$0x3] %vm633, 0.0
      %641 = vst.msk [vmem:[#allocation2 + $0x3a] sm:$0x3] %vm633, 0.0
      %v642 = vld [vmem:[%s1] sm:$0xf]
      %v643 = vpack.c.bf16 %v632, %v631
      %v644 = vld [vmem:[%s2] sm:$0x1]
      %v646 = vlaneseq
      %v647 = vshrl.u32 %v646, 7
      %v648 = vsub.s32 0, %v647
      %v649 = vrot.slane %v644, %v648
      %vm651 = vcmask 64512
      %v653 = vsel %vm651, %v643, 0
      %vm655 = vcmask 1043456
      %v657 = vsel %vm655, %v642, 0
      %659 = vmatprep.subr.bf16.mxu0 0
      %660 = vmatpush1.bf16.msra.mxu0 %v657
      %661 = vmatprep.subr.bf16.mxu0 0
      %662 = vmatpush1.bf16.msra.mxu0 0
      %663 = vmatprep.subr.bf16.mxu0 0
      %664 = vmatpush1.bf16.msra.mxu0 0
      %665 = vmatprep.subr.bf16.mxu0 0
      %666 = vmatpush1.bf16.msra.mxu0 0
      %667 = vmatprep.subr.bf16.mxu0 0
      %668 = vmatpush1.bf16.msra.mxu0 0
      %669 = vmatprep.subr.bf16.mxu0 0
      %670 = vmatpush1.bf16.msra.mxu0 0
      %671 = vmatprep.subr.bf16.mxu0 0
      %672 = vmatpush1.bf16.msra.mxu0 0
      %673 = vmatprep.subr.bf16.mxu0 0
      %674 = vmatpush1.bf16.msra.mxu0 0
      %675 = vmatprep.subr.bf16.mxu0 0
      %676 = vmatpush1.bf16.msra.mxu0 0
      %677 = vmatprep.subr.bf16.mxu0 0
      %678 = vmatpush1.bf16.msra.mxu0 0
      %679 = vmatprep.subr.bf16.mxu0 0
      %680 = vmatpush1.bf16.msra.mxu0 0
      %681 = vmatprep.subr.bf16.mxu0 0
      %682 = vmatpush1.bf16.msra.mxu0 0
      %683 = vmatprep.subr.bf16.mxu0 0
      %684 = vmatpush1.bf16.msra.mxu0 0
      %685 = vmatprep.subr.bf16.mxu0 0
      %686 = vmatpush1.bf16.msra.mxu0 0
      %687 = vmatprep.subr.bf16.mxu0 0
      %688 = vmatpush1.bf16.msra.mxu0 0
      %689 = vmatprep.subr.bf16.mxu0 0
      %690 = vmatpush1.bf16.msra.mxu0 0
      %691 = vmatprep.mubr.bf16.mxu0 0
      %692 = vmatmul.mubr.bf16.gmra.mrb[0].mxu0 %v653
      %v693 = vpop.f32.mrb[0].mxu0
      %v694 = vadd.f32 %v649, %v693
      %v695 = vpop.f32.mrb[0].mxu0
      %v696 = vpop.f32.mrb[0].mxu0
      %v697 = vadd.f32 %v649, %v696
      %v698 = vpop.f32.mrb[0].mxu0
      %699 = vdwg.mxu0
      %v700 = vld [vmem:[%s3] sm:$0x1]
      %v701 = vld [vmem:[%s4] sm:$0x1]
      %v702 = vld [vmem:[%s5] sm:$0x1]
      %vm703 = vcmask 261120
      %v704 = vsel %vm703, %v694, 0.0
      %v705 = vsel %vm703, %v697, 0.0
      %v706 = vadd.f32 %v704, %v705
      %v707 = vrot.slane %v706, 4
      %v708 = vadd.f32 %v706, %v707
      %v709 = vrot.slane %v708, 2
      %v710 = vadd.f32 %v708, %v709
      %v711 = vrot.slane %v710, 1
      %v712 = vadd.f32 %v710, %v711
      %v713 = vmul.f32 %v694, %v694
      %v714 = vmul.f32 %v697, %v697
      %v715 = vsel %vm703, %v713, 0.0
      %v716 = vsel %vm703, %v714, 0.0
      %v717 = vadd.f32 %v715, %v716
      %v718 = vrot.slane %v717, 4
      %v719 = vadd.f32 %v717, %v718
      %v720 = vrot.slane %v719, 2
      %v721 = vadd.f32 %v719, %v720
      %v722 = vrot.slane %v721, 1
      %v723 = vadd.f32 %v721, %v722
      %vm724 = vcmask 253952
      %v725 = vsel %vm724, %v712, 0.0
      %726 = vadd.xlane.f32.xlu0 %v725
      %v727 = vpop.xlane.xlu0 %726
      %v728 = vrot.slane %v727, 4
      %v729 = vadd.f32 %v727, %v728
      %v730 = vrot.slane %v729, 2
      %v731 = vadd.f32 %v729, %v730
      %v732 = vrot.slane %v731, 1
      %v733 = vadd.f32 %v731, %v732
      %s734 = vtos %v733
      %s735 = smul.f32 %s734, 0.001953125
      %v736 = vsel %vm724, %v723, 0.0
      %737 = vadd.xlane.f32.xlu0 %v736
      %v738 = vpop.xlane.xlu0 %737
      %v739 = vrot.slane %v738, 4
      %v740 = vadd.f32 %v738, %v739
      %v741 = vrot.slane %v740, 2
      %v742 = vadd.f32 %v740, %v741
      %v743 = vrot.slane %v742, 1
      %v744 = vadd.f32 %v742, %v743
      %s745 = vtos %v744
      %s746 = smul.f32 %s745, 0.001953125
      %s747 = smul.f32 %s735, %s735
      %s748 = ssub.f32 %s746, %s747
      %s749 = smax.f32 %s748, 0.0
      %v750 = vstv %s735
      %v751 = vsub.f32 %v694, %v750
      %v752 = vsub.f32 %v697, %v750
      %s753 = sadd.f32 %s749, 1e-08
      %v754 = vstv %s753
      %v755 = vrsqrt.pop %v754
      %s756 = vtos %v755
      %v757 = vstv %s756
      %v758 = vmul.f32 %v751, %v757
      %v759 = vmul.f32 %v752, %v757
      %v761 = vlaneseq
      %v762 = vshrl.u32 %v761, 7
      %v763 = vsub.s32 0, %v762
      %v764 = vrot.slane %v700, %v763
      %v766 = vmul.f32 %v758, %v764
      %v767 = vmul.f32 %v759, %v764
      %v769 = vlaneseq
      %v770 = vshrl.u32 %v769, 7
      %v771 = vsub.s32 0, %v770
      %v772 = vrot.slane %v701, %v771
      %v774 = vadd.f32 %v766, %v772
      %v775 = vadd.f32 %v767, %v772
      %vm776 = vcmp.ge.f32.partialorder %v774, 0.0
      %vm777 = vcmp.ge.f32.partialorder %v775, 0.0
      %v779 = vlaneseq
      %v780 = vshrl.u32 %v779, 7
      %v781 = vsub.s32 0, %v780
      %v782 = vrot.slane %v702, %v781
      %v784 = vmul.f32 %v782, %v774
      %v785 = vmul.f32 %v782, %v775
      %v786 = vsel %vm776, %v774, %v784
      %v787 = vsel %vm777, %v775, %v785
      %788 = vst.msk [vmem:[#allocation2 + $0x2] sm:$0xff] %vm703, %v786
      %789 = vst.msk [vmem:[#allocation2 + $0xa] sm:$0xff] %vm703, %v787
      %v790 = vld [vmem:[%s6] sm:$0x1f]
      %v791 = vld [vmem:[#allocation2] sm:$0xff]
      %v792 = vld [vmem:[#allocation2 + $0x8] sm:$0xff]
      %v793 = vlaneseq
      %v794 = vshrl.u32 %v793, 7
      %v795 = vsub.s32 0, %v794
      %v796 = vrot.slane %v790, %v795
      %v797 = vmul.f32 %v796, %v791
      %v798 = vmul.f32 %v796, %v792
      %v799 = vld [vmem:[#allocation2 + $0x1] sm:$0xff]
      %v800 = vld [vmem:[#allocation2 + $0x9] sm:$0xff]
      %v801 = vlaneseq
      %v802 = vshrl.u32 %v801, 7
      %v803 = vsub.s32 1, %v802
      %v804 = vrot.slane %v790, %v803
      %v805 = vmul.f32 %v804, %v799
      %v806 = vmul.f32 %v804, %v800
      %v807 = vld [vmem:[#allocation2 + $0x2] sm:$0xff]
      %v808 = vld [vmem:[#allocation2 + $0xa] sm:$0xff]
      %v809 = vlaneseq
      %v810 = vshrl.u32 %v809, 7
      %v811 = vsub.s32 2, %v810
      %v812 = vrot.slane %v790, %v811
      %v813 = vmul.f32 %v812, %v807
      %v814 = vmul.f32 %v812, %v808
      %v815 = vld [vmem:[#allocation2 + $0x3] sm:$0xff]
      %v816 = vld [vmem:[#allocation2 + $0xb] sm:$0xff]
      %v817 = vlaneseq
      %v818 = vshrl.u32 %v817, 7
      %v819 = vsub.s32 3, %v818
      %v820 = vrot.slane %v790, %v819
      %v821 = vmul.f32 %v820, %v815
      %v822 = vmul.f32 %v820, %v816
      %v823 = vld [vmem:[#allocation2 + $0x4] sm:$0xff]
      %v824 = vld [vmem:[#allocation2 + $0xc] sm:$0xff]
      %v825 = vlaneseq
      %v826 = vshrl.u32 %v825, 7
      %v827 = vsub.s32 4, %v826
      %v828 = vrot.slane %v790, %v827
      %v829 = vmul.f32 %v828, %v823
      %v830 = vmul.f32 %v828, %v824
      %v831 = vadd.f32 %v797, %v805
      %v832 = vadd.f32 %v798, %v806
      %v833 = vadd.f32 %v831, %v813
      %v834 = vadd.f32 %v832, %v814
      %v835 = vadd.f32 %v833, %v821
      %v836 = vadd.f32 %v834, %v822
      %v837 = vadd.f32 %v835, %v829
      %v838 = vadd.f32 %v836, %v830
      %v839 = vld [vmem:[%s7] sm:$0x1]
      %v841 = vlaneseq
      %v842 = vshrl.u32 %v841, 7
      %v843 = vsub.s32 0, %v842
      %v844 = vrot.slane %v839, %v843
      %v846 = vadd.f32 %v837, %v844
      %v847 = vadd.f32 %v838, %v844
      %v848 = vld [vmem:[%s8] sm:$0x1]
      %v849 = vld [vmem:[%s9] sm:$0x1]
      %v850 = vsel %vm703, %v846, 0.0
      %v851 = vsel %vm703, %v847, 0.0
      %v852 = vadd.f32 %v850, %v851
      %v853 = vrot.slane %v852, 4
      %v854 = vadd.f32 %v852, %v853
      %v855 = vrot.slane %v854, 2
      %v856 = vadd.f32 %v854, %v855
      %v857 = vrot.slane %v856, 1
      %v858 = vadd.f32 %v856, %v857
      %v859 = vmul.f32 %v846, %v846
      %v860 = vmul.f32 %v847, %v847
      %v861 = vsel %vm703, %v859, 0.0
      %v862 = vsel %vm703, %v860, 0.0
      %v863 = vadd.f32 %v861, %v862
      %v864 = vrot.slane %v863, 4
      %v865 = vadd.f32 %v863, %v864
      %v866 = vrot.slane %v865, 2
      %v867 = vadd.f32 %v865, %v866
      %v868 = vrot.slane %v867, 1
      %v869 = vadd.f32 %v867, %v868
      %v870 = vsel %vm724, %v858, 0.0
      %871 = vadd.xlane.f32.xlu0 %v870
      %v872 = vpop.xlane.xlu0 %871
      %v873 = vrot.slane %v872, 4
      %v874 = vadd.f32 %v872, %v873
      %v875 = vrot.slane %v874, 2
      %v876 = vadd.f32 %v874, %v875
      %v877 = vrot.slane %v876, 1
      %v878 = vadd.f32 %v876, %v877
      %s879 = vtos %v878
      %s880 = smul.f32 %s879, 0.001953125
      %v881 = vsel %vm724, %v869, 0.0
      %882 = vadd.xlane.f32.xlu0 %v881
      %v883 = vpop.xlane.xlu0 %882
      %v884 = vrot.slane %v883, 4
      %v885 = vadd.f32 %v883, %v884
      %v886 = vrot.slane %v885, 2
      %v887 = vadd.f32 %v885, %v886
      %v888 = vrot.slane %v887, 1
      %v889 = vadd.f32 %v887, %v888
      %s890 = vtos %v889
      %s891 = smul.f32 %s890, 0.001953125
      %s892 = smul.f32 %s880, %s880
      %s893 = ssub.f32 %s891, %s892
      %s894 = smax.f32 %s893, 0.0
      %v895 = vstv %s880
      %v896 = vsub.f32 %v846, %v895
      %v897 = vsub.f32 %v847, %v895
      %s898 = sadd.f32 %s894, 1e-08
      %v899 = vstv %s898
      %v900 = vrsqrt.pop %v899
      %s901 = vtos %v900
      %v902 = vstv %s901
      %v903 = vmul.f32 %v896, %v902
      %v904 = vmul.f32 %v897, %v902
      %v906 = vlaneseq
      %v907 = vshrl.u32 %v906, 7
      %v908 = vsub.s32 0, %v907
      %v909 = vrot.slane %v848, %v908
      %v911 = vmul.f32 %v903, %v909
      %v912 = vmul.f32 %v904, %v909
      %v914 = vlaneseq
      %v915 = vshrl.u32 %v914, 7
      %v916 = vsub.s32 0, %v915
      %v917 = vrot.slane %v849, %v916
      %v919 = vadd.f32 %v911, %v917
      %v920 = vadd.f32 %v912, %v917
      %921 = vst.msk [vmem:[#allocation2 + $0x16] sm:$0xff] %vm703, %v919
      %922 = vst.msk [vmem:[#allocation2 + $0x1e] sm:$0xff] %vm703, %v920
      %s923 = scalar_lea.vmem %s6, 8
      %v924 = vld [vmem:[%s923] sm:$0x1f]
      %s925 = scalar_lea.vmem [#allocation2], 20
      %v926 = vld [vmem:[%s925] ss:$2 sm:$0xff]
      %v927 = vlaneseq
      %v928 = vshrl.u32 %v927, 7
      %v929 = vsub.s32 0, %v928
      %v930 = vrot.slane %v924, %v929
      %v931 = vmul.f32 %v930, %v926
      %s932 = scalar_lea.vmem [#allocation2], 21
      %v933 = vld [vmem:[%s932] ss:$2 sm:$0xff]
      %v934 = vlaneseq
      %v935 = vshrl.u32 %v934, 7
      %v936 = vsub.s32 1, %v935
      %v937 = vrot.slane %v924, %v936
      %v938 = vmul.f32 %v937, %v933
      %s939 = scalar_lea.vmem [#allocation2], 22
      %v940 = vld [vmem:[%s939] ss:$2 sm:$0xff]
      %v941 = vlaneseq
      %v942 = vshrl.u32 %v941, 7
      %v943 = vsub.s32 2, %v942
      %v944 = vrot.slane %v924, %v943
      %v945 = vmul.f32 %v944, %v940
      %s946 = scalar_lea.vmem [#allocation2], 23
      %v947 = vld [vmem:[%s946] ss:$2 sm:$0xff]
      %v948 = vlaneseq
      %v949 = vshrl.u32 %v948, 7
      %v950 = vsub.s32 3, %v949
      %v951 = vrot.slane %v924, %v950
      %v952 = vmul.f32 %v951, %v947
      %s953 = scalar_lea.vmem [#allocation2], 24
      %v954 = vld [vmem:[%s953] ss:$2 sm:$0xff]
      %v955 = vlaneseq
      %v956 = vshrl.u32 %v955, 7
      %v957 = vsub.s32 4, %v956
      %v958 = vrot.slane %v924, %v957
      %v959 = vmul.f32 %v958, %v954
      %v960 = vadd.f32 %v931, %v938
      %v961 = vadd.f32 %v960, %v945
      %v962 = vadd.f32 %v961, %v952
      %v963 = vadd.f32 %v962, %v959
      %s964 = scalar_lea.vmem %s7, 1
      %v965 = vld [vmem:[%s964] sm:$0x1]
      %v967 = vlaneseq
      %v968 = vshrl.u32 %v967, 7
      %v969 = vsub.s32 0, %v968
      %v970 = vrot.slane %v965, %v969
      %v972 = vadd.f32 %v963, %v970
      %s973 = scalar_lea.vmem %s8, 1
      %v974 = vld [vmem:[%s973] sm:$0x1]
      %s975 = scalar_lea.vmem %s9, 1
      %v976 = vld [vmem:[%s975] sm:$0x1]
      %v977 = vsel %vm703, %v972, 0.0
      %v978 = vrot.slane %v977, 4
      %v979 = vadd.f32 %v977, %v978
      %v980 = vrot.slane %v979, 2
      %v981 = vadd.f32 %v979, %v980
      %v982 = vrot.slane %v981, 1
      %v983 = vadd.f32 %v981, %v982
      %v984 = vmul.f32 %v972, %v972
      %v985 = vsel %vm703, %v984, 0.0
      %v986 = vrot.slane %v985, 4
      %v987 = vadd.f32 %v985, %v986
      %v988 = vrot.slane %v987, 2
      %v989 = vadd.f32 %v987, %v988
      %v990 = vrot.slane %v989, 1
      %v991 = vadd.f32 %v989, %v990
      %v992 = vsel %vm724, %v983, 0.0
      %993 = vadd.xlane.f32.xlu0 %v992
      %v994 = vpop.xlane.xlu0 %993
      %v995 = vrot.slane %v994, 4
      %v996 = vadd.f32 %v994, %v995
      %v997 = vrot.slane %v996, 2
      %v998 = vadd.f32 %v996, %v997
      %v999 = vrot.slane %v998, 1
      %v1000 = vadd.f32 %v998, %v999
      %s1001 = vtos %v1000
      %s1002 = smul.f32 %s1001, 0.00390625
      %v1003 = vsel %vm724, %v991, 0.0
      %1004 = vadd.xlane.f32.xlu0 %v1003
      %v1005 = vpop.xlane.xlu0 %1004
      %v1006 = vrot.slane %v1005, 4
      %v1007 = vadd.f32 %v1005, %v1006
      %v1008 = vrot.slane %v1007, 2
      %v1009 = vadd.f32 %v1007, %v1008
      %v1010 = vrot.slane %v1009, 1
      %v1011 = vadd.f32 %v1009, %v1010
      %s1012 = vtos %v1011
      %s1013 = smul.f32 %s1012, 0.00390625
      %s1014 = smul.f32 %s1002, %s1002
      %s1015 = ssub.f32 %s1013, %s1014
      %s1016 = smax.f32 %s1015, 0.0
      %v1017 = vstv %s1002
      %v1018 = vsub.f32 %v972, %v1017
      %s1019 = sadd.f32 %s1016, 1e-08
      %v1020 = vstv %s1019
      %v1021 = vrsqrt.pop %v1020
      %s1022 = vtos %v1021
      %v1023 = vstv %s1022
      %v1024 = vmul.f32 %v1018, %v1023
      %v1026 = vlaneseq
      %v1027 = vshrl.u32 %v1026, 7
      %v1028 = vsub.s32 0, %v1027
      %v1029 = vrot.slane %v974, %v1028
      %v1031 = vmul.f32 %v1024, %v1029
      %v1033 = vlaneseq
      %v1034 = vshrl.u32 %v1033, 7
      %v1035 = vsub.s32 0, %v1034
      %v1036 = vrot.slane %v976, %v1035
      %v1038 = vadd.f32 %v1031, %v1036
      %1039 = vst.msk [vmem:[#allocation2 + $0x2a] sm:$0xff] %vm703, %v1038
      %s1040 = scalar_lea.vmem %s6, 16
      %v1041 = vld [vmem:[%s1040] sm:$0x1f]
      %s1042 = scalar_lea.vmem [#allocation2], 40
      %v1043 = vld [vmem:[%s1042] ss:$2 sm:$0xf]
      %v1044 = vlaneseq
      %v1045 = vshrl.u32 %v1044, 7
      %v1046 = vsub.s32 0, %v1045
      %v1047 = vrot.slane %v1041, %v1046
      %v1048 = vmul.f32 %v1047, %v1043
      %s1049 = scalar_lea.vmem [#allocation2], 41
      %v1050 = vld [vmem:[%s1049] ss:$2 sm:$0xf]
      %v1051 = vlaneseq
      %v1052 = vshrl.u32 %v1051, 7
      %v1053 = vsub.s32 1, %v1052
      %v1054 = vrot.slane %v1041, %v1053
      %v1055 = vmul.f32 %v1054, %v1050
      %s1056 = scalar_lea.vmem [#allocation2], 42
      %v1057 = vld [vmem:[%s1056] ss:$2 sm:$0xf]
      %v1058 = vlaneseq
      %v1059 = vshrl.u32 %v1058, 7
      %v1060 = vsub.s32 2, %v1059
      %v1061 = vrot.slane %v1041, %v1060
      %v1062 = vmul.f32 %v1061, %v1057
      %s1063 = scalar_lea.vmem [#allocation2], 43
      %v1064 = vld [vmem:[%s1063] ss:$2 sm:$0xf]
      %v1065 = vlaneseq
      %v1066 = vshrl.u32 %v1065, 7
      %v1067 = vsub.s32 3, %v1066
      %v1068 = vrot.slane %v1041, %v1067
      %v1069 = vmul.f32 %v1068, %v1064
      %s1070 = scalar_lea.vmem [#allocation2], 44
      %v1071 = vld [vmem:[%s1070] ss:$2 sm:$0xf]
      %v1072 = vlaneseq
      %v1073 = vshrl.u32 %v1072, 7
      %v1074 = vsub.s32 4, %v1073
      %v1075 = vrot.slane %v1041, %v1074
      %v1076 = vmul.f32 %v1075, %v1071
      %v1077 = vadd.f32 %v1048, %v1055
      %v1078 = vadd.f32 %v1077, %v1062
      %v1079 = vadd.f32 %v1078, %v1069
      %v1080 = vadd.f32 %v1079, %v1076
      %s1081 = scalar_lea.vmem %s7, 2
      %v1082 = vld [vmem:[%s1081] sm:$0x1]
      %v1084 = vlaneseq
      %v1085 = vshrl.u32 %v1084, 7
      %v1086 = vsub.s32 0, %v1085
      %v1087 = vrot.slane %v1082, %v1086
      %v1089 = vadd.f32 %v1080, %v1087
      %s1090 = scalar_lea.vmem %s8, 2
      %v1091 = vld [vmem:[%s1090] sm:$0x1]
      %s1092 = scalar_lea.vmem %s9, 2
      %v1093 = vld [vmem:[%s1092] sm:$0x1]
      %vm1094 = vcmask 257024
      %v1095 = vsel %vm1094, %v1089, 0.0
      %v1096 = vrot.slane %v1095, 4
      %v1097 = vadd.f32 %v1095, %v1096
      %v1098 = vrot.slane %v1097, 2
      %v1099 = vadd.f32 %v1097, %v1098
      %v1100 = vrot.slane %v1099, 1
      %v1101 = vadd.f32 %v1099, %v1100
      %v1102 = vmul.f32 %v1089, %v1089
      %v1103 = vsel %vm1094, %v1102, 0.0
      %v1104 = vrot.slane %v1103, 4
      %v1105 = vadd.f32 %v1103, %v1104
      %v1106 = vrot.slane %v1105, 2
      %v1107 = vadd.f32 %v1105, %v1106
      %v1108 = vrot.slane %v1107, 1
      %v1109 = vadd.f32 %v1107, %v1108
      %v1110 = vsel %vm724, %v1101, 0.0
      %1111 = vadd.xlane.f32.xlu0 %v1110
      %v1112 = vpop.xlane.xlu0 %1111
      %v1113 = vrot.slane %v1112, 4
      %v1114 = vadd.f32 %v1112, %v1113
      %v1115 = vrot.slane %v1114, 2
      %v1116 = vadd.f32 %v1114, %v1115
      %v1117 = vrot.slane %v1116, 1
      %v1118 = vadd.f32 %v1116, %v1117
      %s1119 = vtos %v1118
      %s1120 = smul.f32 %s1119, 0.0078125
      %v1121 = vsel %vm724, %v1109, 0.0
      %1122 = vadd.xlane.f32.xlu0 %v1121
      %v1123 = vpop.xlane.xlu0 %1122
      %v1124 = vrot.slane %v1123, 4
      %v1125 = vadd.f32 %v1123, %v1124
      %v1126 = vrot.slane %v1125, 2
      %v1127 = vadd.f32 %v1125, %v1126
      %v1128 = vrot.slane %v1127, 1
      %v1129 = vadd.f32 %v1127, %v1128
      %s1130 = vtos %v1129
      %s1131 = smul.f32 %s1130, 0.0078125
      %s1132 = smul.f32 %s1120, %s1120
      %s1133 = ssub.f32 %s1131, %s1132
      %s1134 = smax.f32 %s1133, 0.0
      %v1135 = vstv %s1120
      %v1136 = vsub.f32 %v1089, %v1135
      %s1137 = sadd.f32 %s1134, 1e-08
      %v1138 = vstv %s1137
      %v1139 = vrsqrt.pop %v1138
      %s1140 = vtos %v1139
      %v1141 = vstv %s1140
      %v1142 = vmul.f32 %v1136, %v1141
      %v1144 = vlaneseq
      %v1145 = vshrl.u32 %v1144, 7
      %v1146 = vsub.s32 0, %v1145
      %v1147 = vrot.slane %v1091, %v1146
      %v1149 = vmul.f32 %v1142, %v1147
      %v1151 = vlaneseq
      %v1152 = vshrl.u32 %v1151, 7
      %v1153 = vsub.s32 0, %v1152
      %v1154 = vrot.slane %v1093, %v1153
      %v1156 = vadd.f32 %v1149, %v1154
      %1157 = vst.msk [vmem:[#allocation2 + $0x36] sm:$0xf] %vm1094, %v1156
      %s1158 = scalar_lea.vmem %s6, 24
      %v1159 = vld [vmem:[%s1158] sm:$0x1f]
      %s1160 = scalar_lea.vmem [#allocation2], 52
      %v1161 = vld [vmem:[%s1160] ss:$2 sm:$0x3]
      %v1162 = vlaneseq
      %v1163 = vshrl.u32 %v1162, 7
      %v1164 = vsub.s32 0, %v1163
      %v1165 = vrot.slane %v1159, %v1164
      %v1166 = vmul.f32 %v1165, %v1161
      %s1167 = scalar_lea.vmem [#allocation2], 53
      %v1168 = vld [vmem:[%s1167] ss:$2 sm:$0x3]
      %v1169 = vlaneseq
      %v1170 = vshrl.u32 %v1169, 7
      %v1171 = vsub.s32 1, %v1170
      %v1172 = vrot.slane %v1159, %v1171
      %v1173 = vmul.f32 %v1172, %v1168
      %s1174 = scalar_lea.vmem [#allocation2], 54
      %v1175 = vld [vmem:[%s1174] ss:$2 sm:$0x3]
      %v1176 = vlaneseq
      %v1177 = vshrl.u32 %v1176, 7
      %v1178 = vsub.s32 2, %v1177
      %v1179 = vrot.slane %v1159, %v1178
      %v1180 = vmul.f32 %v1179, %v1175
      %s1181 = scalar_lea.vmem [#allocation2], 55
      %v1182 = vld [vmem:[%s1181] ss:$2 sm:$0x3]
      %v1183 = vlaneseq
      %v1184 = vshrl.u32 %v1183, 7
      %v1185 = vsub.s32 3, %v1184
      %v1186 = vrot.slane %v1159, %v1185
      %v1187 = vmul.f32 %v1186, %v1182
      %s1188 = scalar_lea.vmem [#allocation2], 56
      %v1189 = vld [vmem:[%s1188] ss:$2 sm:$0x3]
      %v1190 = vlaneseq
      %v1191 = vshrl.u32 %v1190, 7
      %v1192 = vsub.s32 4, %v1191
      %v1193 = vrot.slane %v1159, %v1192
      %v1194 = vmul.f32 %v1193, %v1189
      %v1195 = vadd.f32 %v1166, %v1173
      %v1196 = vadd.f32 %v1195, %v1180
      %v1197 = vadd.f32 %v1196, %v1187
      %v1198 = vadd.f32 %v1197, %v1194
      %s1199 = scalar_lea.vmem %s7, 3
      %v1200 = vld [vmem:[%s1199] sm:$0x1]
      %v1202 = vlaneseq
      %v1203 = vshrl.u32 %v1202, 7
      %v1204 = vsub.s32 0, %v1203
      %v1205 = vrot.slane %v1200, %v1204
      %v1207 = vadd.f32 %v1198, %v1205
      %s1208 = scalar_lea.vmem %s8, 3
      %v1209 = vld [vmem:[%s1208] sm:$0x1]
      %s1210 = scalar_lea.vmem %s9, 3
      %v1211 = vld [vmem:[%s1210] sm:$0x1]
      %v1212 = vsel %vm633, %v1207, 0.0
      %v1213 = vrot.slane %v1212, 4
      %v1214 = vadd.f32 %v1212, %v1213
      %v1215 = vrot.slane %v1214, 2
      %v1216 = vadd.f32 %v1214, %v1215
      %v1217 = vrot.slane %v1216, 1
      %v1218 = vadd.f32 %v1216, %v1217
      %v1219 = vmul.f32 %v1207, %v1207
      %v1220 = vsel %vm633, %v1219, 0.0
      %v1221 = vrot.slane %v1220, 4
      %v1222 = vadd.f32 %v1220, %v1221
      %v1223 = vrot.slane %v1222, 2
      %v1224 = vadd.f32 %v1222, %v1223
      %v1225 = vrot.slane %v1224, 1
      %v1226 = vadd.f32 %v1224, %v1225
      %v1227 = vsel %vm724, %v1218, 0.0
      %1228 = vadd.xlane.f32.xlu0 %v1227
      %v1229 = vpop.xlane.xlu0 %1228
      %v1230 = vrot.slane %v1229, 4
      %v1231 = vadd.f32 %v1229, %v1230
      %v1232 = vrot.slane %v1231, 2
      %v1233 = vadd.f32 %v1231, %v1232
      %v1234 = vrot.slane %v1233, 1
      %v1235 = vadd.f32 %v1233, %v1234
      %s1236 = vtos %v1235
      %s1237 = smul.f32 %s1236, 0.015625
      %v1238 = vsel %vm724, %v1226, 0.0
      %1239 = vadd.xlane.f32.xlu0 %v1238
      %v1240 = vpop.xlane.xlu0 %1239
      %v1241 = vrot.slane %v1240, 4
      %v1242 = vadd.f32 %v1240, %v1241
      %v1243 = vrot.slane %v1242, 2
      %v1244 = vadd.f32 %v1242, %v1243
      %v1245 = vrot.slane %v1244, 1
      %v1246 = vadd.f32 %v1244, %v1245
      %s1247 = vtos %v1246
      %s1248 = smul.f32 %s1247, 0.015625
      %s1249 = smul.f32 %s1237, %s1237
      %s1250 = ssub.f32 %s1248, %s1249
      %s1251 = smax.f32 %s1250, 0.0
      %v1252 = vstv %s1237
      %v1253 = vsub.f32 %v1207, %v1252
      %s1254 = sadd.f32 %s1251, 1e-08
      %v1255 = vstv %s1254
      %v1256 = vrsqrt.pop %v1255
      %s1257 = vtos %v1256
      %v1258 = vstv %s1257
      %v1259 = vmul.f32 %v1253, %v1258
      %v1261 = vlaneseq
      %v1262 = vshrl.u32 %v1261, 7
      %v1263 = vsub.s32 0, %v1262
      %v1264 = vrot.slane %v1209, %v1263
      %v1266 = vmul.f32 %v1259, %v1264
      %v1268 = vlaneseq
      %v1269 = vshrl.u32 %v1268, 7
      %v1270 = vsub.s32 0, %v1269
      %v1271 = vrot.slane %v1211, %v1270
      %v1273 = vadd.f32 %v1266, %v1271
      %1274 = vst [vmem:[#allocation2] ss:$2 sm:$0x3] %v1273
      %s1275 = scalar_lea.vmem [#allocation2], 1
      %1276 = vst [vmem:[%s1275] ss:$2 sm:$0x3] %v1273
      %v1277 = vld [vmem:[#allocation2 + $0x36] sm:$0xf]
      %v1278 = vld [vmem:[#allocation2] sm:$0xf]
      %v1279 = vadd.f32 %v1277, %v1278
      %1280 = vst [vmem:[#allocation2] ss:$2 sm:$0xf] %v1279
      %1281 = vst [vmem:[%s1275] ss:$2 sm:$0xf] %v1279
      %v1282 = vld [vmem:[#allocation2 + $0x2a] sm:$0xff]
      %v1283 = vld [vmem:[#allocation2] sm:$0xff]
      %v1284 = vadd.f32 %v1282, %v1283
      %1285 = vst [vmem:[#allocation2] ss:$2 sm:$0xff] %v1284
      %1286 = vst [vmem:[%s1275] ss:$2 sm:$0xff] %v1284
      %v1287 = vld [vmem:[#allocation2 + $0x16] sm:$0xff]
      %v1288 = vld [vmem:[#allocation2 + $0x1e] sm:$0xff]
      %v1289 = vld [vmem:[#allocation2] sm:$0xff]
      %v1290 = vld [vmem:[#allocation2 + $0x8] sm:$0xff]
      %v1291 = vadd.f32 %v1287, %v1289
      %v1292 = vadd.f32 %v1288, %v1290
      %v1293 = vld [vmem:[%s10] sm:$0x1]
      %v1294 = vld [vmem:[%s11] sm:$0x1]
      %v1295 = vld [vmem:[%s12] sm:$0x1]
      %v1296 = vsel %vm703, %v1291, 0.0
      %v1297 = vsel %vm703, %v1292, 0.0
      %v1298 = vadd.f32 %v1296, %v1297
      %v1299 = vrot.slane %v1298, 4
      %v1300 = vadd.f32 %v1298, %v1299
      %v1301 = vrot.slane %v1300, 2
      %v1302 = vadd.f32 %v1300, %v1301
      %v1303 = vrot.slane %v1302, 1
      %v1304 = vadd.f32 %v1302, %v1303
      %v1305 = vmul.f32 %v1291, %v1291
      %v1306 = vmul.f32 %v1292, %v1292
      %v1307 = vsel %vm703, %v1305, 0.0
      %v1308 = vsel %vm703, %v1306, 0.0
      %v1309 = vadd.f32 %v1307, %v1308
      %v1310 = vrot.slane %v1309, 4
      %v1311 = vadd.f32 %v1309, %v1310
      %v1312 = vrot.slane %v1311, 2
      %v1313 = vadd.f32 %v1311, %v1312
      %v1314 = vrot.slane %v1313, 1
      %v1315 = vadd.f32 %v1313, %v1314
      %v1316 = vsel %vm724, %v1304, 0.0
      %1317 = vadd.xlane.f32.xlu0 %v1316
      %v1318 = vpop.xlane.xlu0 %1317
      %v1319 = vrot.slane %v1318, 4
      %v1320 = vadd.f32 %v1318, %v1319
      %v1321 = vrot.slane %v1320, 2
      %v1322 = vadd.f32 %v1320, %v1321
      %v1323 = vrot.slane %v1322, 1
      %v1324 = vadd.f32 %v1322, %v1323
      %s1325 = vtos %v1324
      %s1326 = smul.f32 %s1325, 0.001953125
      %v1327 = vsel %vm724, %v1315, 0.0
      %1328 = vadd.xlane.f32.xlu0 %v1327
      %v1329 = vpop.xlane.xlu0 %1328
      %v1330 = vrot.slane %v1329, 4
      %v1331 = vadd.f32 %v1329, %v1330
      %v1332 = vrot.slane %v1331, 2
      %v1333 = vadd.f32 %v1331, %v1332
      %v1334 = vrot.slane %v1333, 1
      %v1335 = vadd.f32 %v1333, %v1334
      %s1336 = vtos %v1335
      %s1337 = smul.f32 %s1336, 0.001953125
      %s1338 = smul.f32 %s1326, %s1326
      %s1339 = ssub.f32 %s1337, %s1338
      %s1340 = smax.f32 %s1339, 0.0
      %v1341 = vstv %s1326
      %v1342 = vsub.f32 %v1291, %v1341
      %v1343 = vsub.f32 %v1292, %v1341
      %s1344 = sadd.f32 %s1340, 1e-08
      %v1345 = vstv %s1344
      %v1346 = vrsqrt.pop %v1345
      %s1347 = vtos %v1346
      %v1348 = vstv %s1347
      %v1349 = vmul.f32 %v1342, %v1348
      %v1350 = vmul.f32 %v1343, %v1348
      %v1352 = vlaneseq
      %v1353 = vshrl.u32 %v1352, 7
      %v1354 = vsub.s32 0, %v1353
      %v1355 = vrot.slane %v1293, %v1354
      %v1357 = vmul.f32 %v1349, %v1355
      %v1358 = vmul.f32 %v1350, %v1355
      %v1360 = vlaneseq
      %v1361 = vshrl.u32 %v1360, 7
      %v1362 = vsub.s32 0, %v1361
      %v1363 = vrot.slane %v1294, %v1362
      %v1365 = vadd.f32 %v1357, %v1363
      %v1366 = vadd.f32 %v1358, %v1363
      %vm1367 = vcmp.ge.f32.partialorder %v1365, 0.0
      %vm1368 = vcmp.ge.f32.partialorder %v1366, 0.0
      %v1370 = vlaneseq
      %v1371 = vshrl.u32 %v1370, 7
      %v1372 = vsub.s32 0, %v1371
      %v1373 = vrot.slane %v1295, %v1372
      %v1375 = vmul.f32 %v1373, %v1365
      %v1376 = vmul.f32 %v1373, %v1366
      %v1377 = vsel %vm1367, %v1365, %v1375
      %v1378 = vsel %vm1368, %v1366, %v1376
      %v1379 = vld [vmem:[%s13] sm:$0xf]
      %v1380 = vld [vmem:[%s13 + $0x4] sm:$0xf]
      %v1381 = vld [vmem:[%s13 + $0x8] sm:$0xf]
      %v1382 = vld [vmem:[%s13 + $0xc] sm:$0xf]
      %v1383 = vpack.c.bf16 %v1378, %v1377
      %v1384 = vld [vmem:[%s14] sm:$0x1]
      %v1386 = vlaneseq
      %v1387 = vshrl.u32 %v1386, 7
      %v1388 = vsub.s32 0, %v1387
      %v1389 = vrot.slane %v1384, %v1388
      %v1395 = vunpack.c.l.b16 %v1379
      %v1396 = vunpack.c.l.b16 %v1380
      %v1397 = vunpack.c.l.b16 %v1381
      %v1398 = vunpack.c.l.b16 %v1382
      %v1399 = vpack.c.b16 %v1396, %v1395
      %v1400 = vpack.c.b16 %v1398, %v1397
      %v1404 = vsel %vm703, %v1383, 0
      %1406 = vmatprep.subr.bf16.mxu0 0
      %1407 = vmatpush1.bf16.msra.mxu0 %v1399
      %1408 = vmatprep.subr.bf16.mxu0 0
      %1409 = vmatpush1.bf16.msra.mxu0 %v1400
      %1410 = vmatprep.subr.bf16.mxu0 0
      %1411 = vmatpush1.bf16.msra.mxu0 0
      %1412 = vmatprep.subr.bf16.mxu0 0
      %1413 = vmatpush1.bf16.msra.mxu0 0
      %1414 = vmatprep.subr.bf16.mxu0 0
      %1415 = vmatpush1.bf16.msra.mxu0 0
      %1416 = vmatprep.subr.bf16.mxu0 0
      %1417 = vmatpush1.bf16.msra.mxu0 0
      %1418 = vmatprep.subr.bf16.mxu0 0
      %1419 = vmatpush1.bf16.msra.mxu0 0
      %1420 = vmatprep.subr.bf16.mxu0 0
      %1421 = vmatpush1.bf16.msra.mxu0 0
      %1422 = vmatprep.subr.bf16.mxu0 0
      %1423 = vmatpush1.bf16.msra.mxu0 0
      %1424 = vmatprep.subr.bf16.mxu0 0
      %1425 = vmatpush1.bf16.msra.mxu0 0
      %1426 = vmatprep.subr.bf16.mxu0 0
      %1427 = vmatpush1.bf16.msra.mxu0 0
      %1428 = vmatprep.subr.bf16.mxu0 0
      %1429 = vmatpush1.bf16.msra.mxu0 0
      %1430 = vmatprep.subr.bf16.mxu0 0
      %1431 = vmatpush1.bf16.msra.mxu0 0
      %1432 = vmatprep.subr.bf16.mxu0 0
      %1433 = vmatpush1.bf16.msra.mxu0 0
      %1434 = vmatprep.subr.bf16.mxu0 0
      %1435 = vmatpush1.bf16.msra.mxu0 0
      %1436 = vmatprep.subr.bf16.mxu0 0
      %1437 = vmatpush1.bf16.msra.mxu0 0
      %1438 = vmatprep.mubr.bf16.mxu0 0
      %1439 = vmatmul.mubr.bf16.gmra.mrb[0].mxu0 %v1404
      %v1440 = vpop.f32.mrb[0].mxu0
      %v1441 = vadd.f32 %v1389, %v1440
      %v1442 = vpop.f32.mrb[0].mxu0
      %v1443 = vpop.f32.mrb[0].mxu0
      %v1444 = vadd.f32 %v1389, %v1443
      %v1445 = vpop.f32.mrb[0].mxu0
      %1446 = vdwg.mxu0
      %v1447 = vld [vmem:[%s15] sm:$0x1]
      %v1448 = vld [vmem:[%s16] sm:$0x1]
      %v1449 = vsel %vm651, %v1441, 0.0
      %v1450 = vsel %vm651, %v1444, 0.0
      %v1451 = vadd.f32 %v1449, %v1450
      %v1452 = vrot.slane %v1451, 4
      %v1453 = vadd.f32 %v1451, %v1452
      %v1454 = vrot.slane %v1453, 2
      %v1455 = vadd.f32 %v1453, %v1454
      %v1456 = vrot.slane %v1455, 1
      %v1457 = vadd.f32 %v1455, %v1456
      %v1458 = vmul.f32 %v1441, %v1441
      %v1459 = vmul.f32 %v1444, %v1444
      %v1460 = vsel %vm651, %v1458, 0.0
      %v1461 = vsel %vm651, %v1459, 0.0
      %v1462 = vadd.f32 %v1460, %v1461
      %v1463 = vrot.slane %v1462, 4
      %v1464 = vadd.f32 %v1462, %v1463
      %v1465 = vrot.slane %v1464, 2
      %v1466 = vadd.f32 %v1464, %v1465
      %v1467 = vrot.slane %v1466, 1
      %v1468 = vadd.f32 %v1466, %v1467
      %vm1469 = vcmask 57344
      %v1470 = vsel %vm1469, %v1457, 0.0
      %1471 = vadd.xlane.f32.xlu0 %v1470
      %v1472 = vpop.xlane.xlu0 %1471
      %v1473 = vrot.slane %v1472, 4
      %v1474 = vadd.f32 %v1472, %v1473
      %v1475 = vrot.slane %v1474, 2
      %v1476 = vadd.f32 %v1474, %v1475
      %v1477 = vrot.slane %v1476, 1
      %v1478 = vadd.f32 %v1476, %v1477
      %s1479 = vtos %v1478
      %s1480 = smul.f32 %s1479, 0.0078125
      %v1481 = vsel %vm1469, %v1468, 0.0
      %1482 = vadd.xlane.f32.xlu0 %v1481
      %v1483 = vpop.xlane.xlu0 %1482
      %v1484 = vrot.slane %v1483, 4
      %v1485 = vadd.f32 %v1483, %v1484
      %v1486 = vrot.slane %v1485, 2
      %v1487 = vadd.f32 %v1485, %v1486
      %v1488 = vrot.slane %v1487, 1
      %v1489 = vadd.f32 %v1487, %v1488
      %s1490 = vtos %v1489
      %s1491 = smul.f32 %s1490, 0.0078125
      %s1492 = smul.f32 %s1480, %s1480
      %s1493 = ssub.f32 %s1491, %s1492
      %s1494 = smax.f32 %s1493, 0.0
      %v1495 = vstv %s1480
      %v1496 = vsub.f32 %v1441, %v1495
      %v1497 = vsub.f32 %v1444, %v1495
      %s1498 = sadd.f32 %s1494, 1e-08
      %v1499 = vstv %s1498
      %v1500 = vrsqrt.pop %v1499
      %s1501 = vtos %v1500
      %v1502 = vstv %s1501
      %v1503 = vmul.f32 %v1496, %v1502
      %v1504 = vmul.f32 %v1497, %v1502
      %v1506 = vlaneseq
      %v1507 = vshrl.u32 %v1506, 7
      %v1508 = vsub.s32 0, %v1507
      %v1509 = vrot.slane %v1447, %v1508
      %v1511 = vmul.f32 %v1503, %v1509
      %v1512 = vmul.f32 %v1504, %v1509
      %v1514 = vlaneseq
      %v1515 = vshrl.u32 %v1514, 7
      %v1516 = vsub.s32 0, %v1515
      %v1517 = vrot.slane %v1448, %v1516
      %v1519 = vadd.f32 %v1511, %v1517
      %v1520 = vadd.f32 %v1512, %v1517
      %v1521 = vadd.f32 %v1519, %v631
      %v1522 = vadd.f32 %v1520, %v632
      %v1523 = vld [vmem:[%s17] sm:$0x1]
      %v1524 = vld [vmem:[%s18] sm:$0x1]
      %v1525 = vld [vmem:[%s19] sm:$0x1]
      %v1526 = vsel %vm651, %v1521, 0.0
      %v1527 = vsel %vm651, %v1522, 0.0
      %v1528 = vadd.f32 %v1526, %v1527
      %v1529 = vrot.slane %v1528, 4
      %v1530 = vadd.f32 %v1528, %v1529
      %v1531 = vrot.slane %v1530, 2
      %v1532 = vadd.f32 %v1530, %v1531
      %v1533 = vrot.slane %v1532, 1
      %v1534 = vadd.f32 %v1532, %v1533
      %v1535 = vmul.f32 %v1521, %v1521
      %v1536 = vmul.f32 %v1522, %v1522
      %v1537 = vsel %vm651, %v1535, 0.0
      %v1538 = vsel %vm651, %v1536, 0.0
      %v1539 = vadd.f32 %v1537, %v1538
      %v1540 = vrot.slane %v1539, 4
      %v1541 = vadd.f32 %v1539, %v1540
      %v1542 = vrot.slane %v1541, 2
      %v1543 = vadd.f32 %v1541, %v1542
      %v1544 = vrot.slane %v1543, 1
      %v1545 = vadd.f32 %v1543, %v1544
      %v1546 = vsel %vm1469, %v1534, 0.0
      %1547 = vadd.xlane.f32.xlu0 %v1546
      %v1548 = vpop.xlane.xlu0 %1547
      %v1549 = vrot.slane %v1548, 4
      %v1550 = vadd.f32 %v1548, %v1549
      %v1551 = vrot.slane %v1550, 2
      %v1552 = vadd.f32 %v1550, %v1551
      %v1553 = vrot.slane %v1552, 1
      %v1554 = vadd.f32 %v1552, %v1553
      %s1555 = vtos %v1554
      %s1556 = smul.f32 %s1555, 0.0078125
      %v1557 = vsel %vm1469, %v1545, 0.0
      %1558 = vadd.xlane.f32.xlu0 %v1557
      %v1559 = vpop.xlane.xlu0 %1558
      %v1560 = vrot.slane %v1559, 4
      %v1561 = vadd.f32 %v1559, %v1560
      %v1562 = vrot.slane %v1561, 2
      %v1563 = vadd.f32 %v1561, %v1562
      %v1564 = vrot.slane %v1563, 1
      %v1565 = vadd.f32 %v1563, %v1564
      %s1566 = vtos %v1565
      %s1567 = smul.f32 %s1566, 0.0078125
      %s1568 = smul.f32 %s1556, %s1556
      %s1569 = ssub.f32 %s1567, %s1568
      %s1570 = smax.f32 %s1569, 0.0
      %v1571 = vstv %s1556
      %v1572 = vsub.f32 %v1521, %v1571
      %v1573 = vsub.f32 %v1522, %v1571
      %s1574 = sadd.f32 %s1570, 1e-08
      %v1575 = vstv %s1574
      %v1576 = vrsqrt.pop %v1575
      %s1577 = vtos %v1576
      %v1578 = vstv %s1577
      %v1579 = vmul.f32 %v1572, %v1578
      %v1580 = vmul.f32 %v1573, %v1578
      %v1582 = vlaneseq
      %v1583 = vshrl.u32 %v1582, 7
      %v1584 = vsub.s32 0, %v1583
      %v1585 = vrot.slane %v1523, %v1584
      %v1587 = vmul.f32 %v1579, %v1585
      %v1588 = vmul.f32 %v1580, %v1585
      %v1590 = vlaneseq
      %v1591 = vshrl.u32 %v1590, 7
      %v1592 = vsub.s32 0, %v1591
      %v1593 = vrot.slane %v1524, %v1592
      %v1595 = vadd.f32 %v1587, %v1593
      %v1596 = vadd.f32 %v1588, %v1593
      %vm1597 = vcmp.ge.f32.partialorder %v1595, 0.0
      %vm1598 = vcmp.ge.f32.partialorder %v1596, 0.0
      %v1600 = vlaneseq
      %v1601 = vshrl.u32 %v1600, 7
      %v1602 = vsub.s32 0, %v1601
      %v1603 = vrot.slane %v1525, %v1602
      %v1605 = vmul.f32 %v1603, %v1595
      %v1606 = vmul.f32 %v1603, %v1596
      %v1607 = vsel %vm1597, %v1595, %v1605
      %v1608 = vsel %vm1598, %v1596, %v1606
      %1609 = vst.msk [vmem:[%s629] sm:$0xff] %vm651, %v1607
      %1610 = vst.msk [vmem:[%s629 + $0x8] sm:$0xff] %vm651, %v1608
      %p1611 = scmp.lt.s32.totalorder %s31, 1
      %s1612 = scalar_select %p1611, %s31, 1
      %s1613 = smul.addr %s1612, 2
      %s1614 = smul.addr %s1613, 8
      %s1615 = scalar_lea.vmem %s20, %s1614
      // Predicated region
      $region101: #{tpu_custom_call.1} parent=99 // pred_check
        %p1616 = pneg %p474
      $region102: #{tpu_custom_call.1} parent=99 // pred_check_branch
        %1618 = sbr.rel (%p1616) target = $region104
      $region103: #{tpu_custom_call.1} parent=99 // pred_region
        _
      $region104: #{tpu_custom_call.1} parent=99 // pred_fallthru
        _
    $region100: #{tpu_custom_call.1} parent=5 // pred_fallthru
      _
    %p1619 = scmp.le.s32.totalorder 2, %s26
    // Predicated region
    $region105: #{tpu_custom_call.1} parent=5 // pred_check
      %p1620 = pneg %p1619
    $region106: #{tpu_custom_call.1} parent=5 // pred_check_branch
      %1622 = sbr.rel (%p1620) target = $region108
    $region107: #{tpu_custom_call.1} parent=5 // pred_region
      %s1623 = ssub.s32 %s26, 2
      // Predicated region
      $region109: #{tpu_custom_call.1} parent=107 // pred_check
        %p1624 = pneg %p480
      $region110: #{tpu_custom_call.1} parent=107 // pred_check_branch
        %1626 = sbr.rel (%p1624) target = $region112
      $region111: #{tpu_custom_call.1} parent=107 // pred_region
        %p1627 = scmp.lt.s32.totalorder %s32, 1
        %s1628 = scalar_select %p1627, %s32, 1
        %s1629 = smul.addr %s1628, 2
        %s1630 = smul.addr %s1629, 8
        %s1631 = scalar_lea.vmem %s20, %s1630
      $region112: #{tpu_custom_call.1} parent=107 // pred_fallthru
        _
    $region108: #{tpu_custom_call.1} parent=5 // pred_fallthru
      _
  $region6: #{tpu_custom_call.1} parent=0 // loop_footer
    %s30 = sadd.s32 1, %s26
  $region7: #{tpu_custom_call.1} parent=0 // loop_footer_branch
    %25 = sbr.rel target = $region3
  $region8: #{tpu_custom_call.1} parent=0 // loop_exit
    _

</llo_original>
